<compile_context>
chip_gen: v7x
topology: tpu7x:2x2x1
jax: 0.10.0
libtpu: 0.0.40
codegen_flags: <defaults>
</compile_context>

<pallas_src>
from functools import partial

import jax
import jax.numpy as jnp
from jax.experimental import pallas as pl
from jax.experimental.pallas import tpu as pltpu

LEAKY_SLOPE = 0.2


# ----------------------------- fused Pallas kernel ---------------------------

def _fused_wgan_d_loss_kernel(z_ref, wg_ref, bg_ref, img_ref, ga_ref,
                              w1_ref, b1_ref, w2r_ref, gram_ref, b2_ref,
                              loss_ref, *, lamda):
    f32 = jnp.float32
    b2 = b2_ref[0, 0]                                        # scalar from SMEM

    real = img_ref[...]                                      # (B, F)
    B = real.shape[0]

    # --- Generator: fake = tanh(z @ Wg + bg) ---------------------------------
    fake = jnp.tanh(
        jnp.dot(z_ref[...], wg_ref[...], preferred_element_type=f32)
        + bg_ref[...])                                       # (B, F)

    # --- D layer 1 on real & fake (W1 resident in VMEM, used once per row) ---
    w1 = w1_ref[...]                                         # (F, H)
    b1 = b1_ref[...]                                         # (1, H)
    rr = jnp.dot(real, w1, preferred_element_type=f32)       # (B, H)  (no bias)
    ff = jnp.dot(fake, w1, preferred_element_type=f32)       # (B, H)

    w2row = w2r_ref[...]                                     # (1, H) == w2^T

    def d_head(pre):                                         # (B,H) -> (B,1)
        h = jnp.where(pre > 0, pre, LEAKY_SLOPE * pre)
        # output width 1: VPU multiply + lane reduce (no N=1 MXU matmul).
        return jnp.sum(h * w2row, axis=1, keepdims=True) + b2

    d_real = d_head(rr + b1)                                 # (B, 1)
    d_fake = d_head(ff + b1)                                 # (B, 1)

    # --- gradient penalty -----------------------------------------------------
    a = ga_ref[...]                                          # (B, 1)
    # x = a*real + (1-a)*fake  =>  x @ W1 = a*(real@W1) + (1-a)*(fake@W1)
    pre_x = a * rr + (1.0 - a) * ff + b1                     # (B, H)
    mask = jnp.where(pre_x > 0, 1.0, LEAKY_SLOPE)            # leaky_relu'
    grad_h = mask * w2row                                    # (B, H) = dD/dh
    # dD/dx = grad_h @ W1^T ;  ||dD/dx||^2 = rowsum((grad_h @ G) * grad_h)
    # with G = W1^T W1 (H,H): avoids the (H,F) transposed weight and the
    # (B,F) gradient intermediate entirely.
    gG = jnp.dot(grad_h, gram_ref[...], preferred_element_type=f32)  # (B, H)
    sq = jnp.sum(gG * grad_h, axis=1, keepdims=True)         # (B, 1)
    grad_norm = jnp.sqrt(sq + 1e-12)                         # eps: safe if differentiated
    gp_terms = (grad_norm - 1.0) ** 2                        # (B, 1)

    # --- loss = -mean(d_real) + mean(d_fake) + lamda*mean(gp_terms) -----------
    inv_b = 1.0 / B
    loss_ref[...] = inv_b * (
        jnp.sum(d_fake - d_real, axis=0, keepdims=True)
        + lamda * jnp.sum(gp_terms, axis=0, keepdims=True))  # (1, 1)


# --------------------------------- wrapper ------------------------------------

def pro_wgan_d_loss(g_params, d_params, z, img, step, alpha, key, lamda=10.0):
    """Forward pass of ProWGANDLoss as one fused Pallas kernel.

    `step` / `alpha` are accepted for API parity with ProGAN's progressive
    fade-in; the synthetic G/D defined here do not consume them.
    """
    # TODO(synk): progressive-growing fade-in (step/alpha) belongs to the
    # external G/D networks, not to the loss math; not modeled by synthetic G/D.
    del step, alpha
    wg, bg = g_params
    w1, b1, w2, b2 = d_params

    B = img.shape[0]
    img_flat = img.reshape(B, -1)
    F = img_flat.shape[1]
    Z = z.shape[1]
    H = w1.shape[1]

    # gp_alpha ~ U(0,1) per sample, broadcast over pixels (matches
    # torch.rand(B,1).expand(...).reshape(img.shape)).
    gp_alpha = jax.random.uniform(key, (B, 1), dtype=jnp.float32)

    # Weight-only preprocessing (no per-sample work outside the kernel):
    w2row = w2.reshape(1, H)                 # w2^T as a lane-dense row
    gram = jnp.dot(w1.T, w1)                 # (H, H) = W1^T W1, computed once
    b2s = b2.reshape(1, 1)

    loss11 = pl.pallas_call(
        partial(_fused_wgan_d_loss_kernel, lamda=float(lamda)),
        out_shape=jax.ShapeDtypeStruct((1, 1), jnp.float32),
        grid=(1,),
        in_specs=[
            pl.BlockSpec((B, Z), lambda i: (0, 0)),          # z
            pl.BlockSpec((Z, F), lambda i: (0, 0)),          # Wg
            pl.BlockSpec((1, F), lambda i: (0, 0)),          # bg
            pl.BlockSpec((B, F), lambda i: (0, 0)),          # img_flat
            pl.BlockSpec((B, 1), lambda i: (0, 0)),          # gp_alpha
            pl.BlockSpec((F, H), lambda i: (0, 0)),          # W1
            pl.BlockSpec((1, H), lambda i: (0, 0)),          # b1
            pl.BlockSpec((1, H), lambda i: (0, 0)),          # w2 row
            pl.BlockSpec((H, H), lambda i: (0, 0)),          # Gram = W1^T W1
            pl.BlockSpec(memory_space=pltpu.MemorySpace.SMEM),  # b2 scalar
        ],
        out_specs=pl.BlockSpec((1, 1), lambda i: (0, 0)),
        compiler_params=pltpu.CompilerParams(
            dimension_semantics=("arbitrary",)),
    )(z, wg, bg, img_flat, gp_alpha, w1, b1, w2row, gram, b2s)

    return loss11[0, 0]


# ------------------------- pure-JAX reference (autodiff) ----------------------

def _loss_reference(g_params, d_params, z, img, key, lamda=10.0):
    wg, bg = g_params
    w1, b1, w2, b2 = d_params
    B = img.shape[0]
    x_real = img.reshape(B, -1)

    def D(x):
        h = x @ w1 + b1
        h = jnp.where(h > 0, h, LEAKY_SLOPE * h)
        return h @ w2 + b2

    fake = jnp.tanh(z @ wg + bg)
    loss_real = -jnp.mean(D(x_real))
    loss_fake = jnp.mean(D(fake))

    a = jax.random.uniform(key, (B, 1), dtype=jnp.float32)
    x = a * x_real + (1.0 - a) * fake
    grads = jax.grad(lambda xx: jnp.sum(D(xx)))(x)           # == autograd.grad w/ ones
    gnorm = jnp.linalg.norm(grads.reshape(B, -1), axis=1)
    gp = lamda * jnp.mean((gnorm - 1.0) ** 2)
    return loss_real + loss_fake + gp


# ----------------------------------- main --------------------------------------

if __name__ == "__main__":
    key = jax.random.PRNGKey(0)
    B, C, Hs, Ws = 2, 4, 16, 16        # image: NCHW
    Z, HID = 8, 32                     # latent dim, D hidden width
    F = C * Hs * Ws

    k_img, k_z, k_wg, k_w1, k_w2, k_gp = jax.random.split(key, 6)

    img = jax.random.normal(k_img, (B, C, Hs, Ws), jnp.float32)
    z = jax.random.normal(k_z, (B, Z), jnp.float32)

    # Synthetic generator params: z -> flattened image
    wg = 0.1 * jax.random.normal(k_wg, (Z, F), jnp.float32)
    bg = jnp.zeros((1, F), jnp.float32)

    # Synthetic discriminator params: 2-layer MLP head -> scalar per sample
    w1 = 0.05 * jax.random.normal(k_w1, (F, HID), jnp.float32)
    b1 = jnp.zeros((1, HID), jnp.float32)
    w2 = 0.1 * jax.random.normal(k_w2, (HID, 1), jnp.float32)
    b2 = jnp.zeros((1, 1), jnp.float32)

    loss = pro_wgan_d_loss((wg, bg), (w1, b1, w2, b2), z, img,
                           step=4, alpha=0.5, key=k_gp)
    jax.block_until_ready(loss)
    assert loss.shape == () and jnp.isfinite(loss)

    # numeric sanity check against an autodiff reference
    ref = _loss_reference((wg, bg), (w1, b1, w2, b2), z, img, k_gp)
    assert jnp.allclose(loss, ref, rtol=1e-4, atol=1e-4), (loss, ref)

    print("KERNEL_OK")
</pallas_src>

<mosaic_0001>
module attributes {stable_mosaic.version = 11 : i64} {
  func.func @_fused_wgan_d_loss_kernel(%arg0: i32, %arg1: memref<2x8xf32, #tpu.memory_space<vmem>>, %arg2: memref<8x1024xf32, #tpu.memory_space<vmem>>, %arg3: memref<1x1024xf32, #tpu.memory_space<vmem>>, %arg4: memref<2x1024xf32, #tpu.memory_space<vmem>>, %arg5: memref<2x1xf32, #tpu.memory_space<vmem>>, %arg6: memref<1024x32xf32, #tpu.memory_space<vmem>>, %arg7: memref<1x32xf32, #tpu.memory_space<vmem>>, %arg8: memref<1x32xf32, #tpu.memory_space<vmem>>, %arg9: memref<32x32xf32, #tpu.memory_space<vmem>>, %arg10: memref<1x1xf32, #tpu.memory_space<smem>>, %arg11: memref<1x1xf32, #tpu.memory_space<vmem>>) attributes {dimension_semantics = [#tpu.dimension_semantics<arbitrary>], iteration_bounds = array<i64: 1>, scalar_prefetch = 0 : i64, scratch_operands = 0 : i64, tpu.core_type = #tpu.core_type<tc>, window_params = [{pipeline_mode = #tpu.pipeline_mode<synchronous>, transform_indices = @transform_0, window_bounds = array<i64: 2, 8>}, {pipeline_mode = #tpu.pipeline_mode<synchronous>, transform_indices = @transform_1, window_bounds = array<i64: 8, 1024>}, {pipeline_mode = #tpu.pipeline_mode<synchronous>, transform_indices = @transform_2, window_bounds = array<i64: 1, 1024>}, {pipeline_mode = #tpu.pipeline_mode<synchronous>, transform_indices = @transform_3, window_bounds = array<i64: 2, 1024>}, {pipeline_mode = #tpu.pipeline_mode<synchronous>, transform_indices = @transform_4, window_bounds = array<i64: 2, 1>}, {pipeline_mode = #tpu.pipeline_mode<synchronous>, transform_indices = @transform_5, window_bounds = array<i64: 1024, 32>}, {pipeline_mode = #tpu.pipeline_mode<synchronous>, transform_indices = @transform_6, window_bounds = array<i64: 1, 32>}, {pipeline_mode = #tpu.pipeline_mode<synchronous>, transform_indices = @transform_7, window_bounds = array<i64: 1, 32>}, {pipeline_mode = #tpu.pipeline_mode<synchronous>, transform_indices = @transform_8, window_bounds = array<i64: 32, 32>}, {transform_indices = @transform_9, window_bounds = array<i64: 1, 1>}, {pipeline_mode = #tpu.pipeline_mode<synchronous>, transform_indices = @transform_10, window_bounds = array<i64: 1, 1>}]} {
    %c0 = arith.constant 0 : index
    %c0_0 = arith.constant 0 : index
    %0 = memref.load %arg10[%c0, %c0_0] : memref<1x1xf32, #tpu.memory_space<smem>>
    %c0_1 = arith.constant 0 : index
    %c0_2 = arith.constant 0 : index
    %1 = vector.load %arg4[%c0_1, %c0_2] : memref<2x1024xf32, #tpu.memory_space<vmem>>, vector<2x1024xf32>
    %c0_3 = arith.constant 0 : index
    %c0_4 = arith.constant 0 : index
    %2 = vector.load %arg1[%c0_3, %c0_4] : memref<2x8xf32, #tpu.memory_space<vmem>>, vector<2x8xf32>
    %c0_5 = arith.constant 0 : index
    %c0_6 = arith.constant 0 : index
    %3 = vector.load %arg2[%c0_5, %c0_6] : memref<8x1024xf32, #tpu.memory_space<vmem>>, vector<8x1024xf32>
    %cst = arith.constant dense<0.000000e+00> : vector<2x1024xf32>
    %4 = tpu.matmul %2, %3, %cst {dimension_numbers = #tpu.dot_dimension_numbers<[1], [0], [0], [1], [0, 0, 1, 1], [], []>} : vector<2x8xf32>, vector<8x1024xf32>, vector<2x1024xf32> -> vector<2x1024xf32>
    %c0_7 = arith.constant 0 : index
    %c0_8 = arith.constant 0 : index
    %5 = vector.load %arg3[%c0_7, %c0_8] : memref<1x1024xf32, #tpu.memory_space<vmem>>, vector<1x1024xf32>
    %6 = vector.broadcast %5 : vector<1x1024xf32> to vector<2x1024xf32>
    %7 = arith.addf %4, %6 : vector<2x1024xf32>
    %8 = math.tanh %7 : vector<2x1024xf32>
    %c0_9 = arith.constant 0 : index
    %c0_10 = arith.constant 0 : index
    %9 = vector.load %arg6[%c0_9, %c0_10] : memref<1024x32xf32, #tpu.memory_space<vmem>>, vector<1024x32xf32>
    %c0_11 = arith.constant 0 : index
    %c0_12 = arith.constant 0 : index
    %10 = vector.load %arg7[%c0_11, %c0_12] : memref<1x32xf32, #tpu.memory_space<vmem>>, vector<1x32xf32>
    %cst_13 = arith.constant dense<0.000000e+00> : vector<2x32xf32>
    %11 = tpu.matmul %1, %9, %cst_13 {dimension_numbers = #tpu.dot_dimension_numbers<[1], [0], [0], [1], [0, 0, 1, 1], [], []>} : vector<2x1024xf32>, vector<1024x32xf32>, vector<2x32xf32> -> vector<2x32xf32>
    %cst_14 = arith.constant dense<0.000000e+00> : vector<2x32xf32>
    %12 = tpu.matmul %8, %9, %cst_14 {dimension_numbers = #tpu.dot_dimension_numbers<[1], [0], [0], [1], [0, 0, 1, 1], [], []>} : vector<2x1024xf32>, vector<1024x32xf32>, vector<2x32xf32> -> vector<2x32xf32>
    %c0_15 = arith.constant 0 : index
    %c0_16 = arith.constant 0 : index
    %13 = vector.load %arg8[%c0_15, %c0_16] : memref<1x32xf32, #tpu.memory_space<vmem>>, vector<1x32xf32>
    %14 = vector.broadcast %10 : vector<1x32xf32> to vector<2x32xf32>
    %15 = arith.addf %11, %14 : vector<2x32xf32>
    %cst_17 = arith.constant 0.000000e+00 : f32
    %16 = vector.broadcast %cst_17 : f32 to vector<2x32xf32>
    %17 = arith.cmpf ogt, %15, %16 : vector<2x32xf32>
    %cst_18 = arith.constant 2.000000e-01 : f32
    %18 = vector.broadcast %cst_18 : f32 to vector<2x32xf32>
    %19 = arith.mulf %18, %15 : vector<2x32xf32>
    %20 = arith.select %17, %15, %19 : vector<2x32xi1>, vector<2x32xf32>
    %21 = vector.broadcast %13 : vector<1x32xf32> to vector<2x32xf32>
    %22 = arith.mulf %20, %21 : vector<2x32xf32>
    %cst_19 = arith.constant dense<0.000000e+00> : vector<2xf32>
    %23 = vector.multi_reduction <add>, %22, %cst_19 [1] : vector<2x32xf32> to vector<2xf32>
    %24 = vector.shape_cast %23 : vector<2xf32> to vector<2x1xf32>
    %25 = vector.broadcast %0 : f32 to vector<2x1xf32>
    %26 = arith.addf %24, %25 : vector<2x1xf32>
    %27 = vector.broadcast %10 : vector<1x32xf32> to vector<2x32xf32>
    %28 = arith.addf %12, %27 : vector<2x32xf32>
    %cst_20 = arith.constant 0.000000e+00 : f32
    %29 = vector.broadcast %cst_20 : f32 to vector<2x32xf32>
    %30 = arith.cmpf ogt, %28, %29 : vector<2x32xf32>
    %cst_21 = arith.constant 2.000000e-01 : f32
    %31 = vector.broadcast %cst_21 : f32 to vector<2x32xf32>
    %32 = arith.mulf %31, %28 : vector<2x32xf32>
    %33 = arith.select %30, %28, %32 : vector<2x32xi1>, vector<2x32xf32>
    %34 = vector.broadcast %13 : vector<1x32xf32> to vector<2x32xf32>
    %35 = arith.mulf %33, %34 : vector<2x32xf32>
    %cst_22 = arith.constant dense<0.000000e+00> : vector<2xf32>
    %36 = vector.multi_reduction <add>, %35, %cst_22 [1] : vector<2x32xf32> to vector<2xf32>
    %37 = vector.shape_cast %36 : vector<2xf32> to vector<2x1xf32>
    %38 = vector.broadcast %0 : f32 to vector<2x1xf32>
    %39 = arith.addf %37, %38 : vector<2x1xf32>
    %c0_23 = arith.constant 0 : index
    %c0_24 = arith.constant 0 : index
    %40 = vector.load %arg5[%c0_23, %c0_24] : memref<2x1xf32, #tpu.memory_space<vmem>>, vector<2x1xf32>
    %41 = vector.broadcast %40 : vector<2x1xf32> to vector<2x32xf32>
    %42 = arith.mulf %41, %11 : vector<2x32xf32>
    %cst_25 = arith.constant 1.000000e+00 : f32
    %43 = vector.broadcast %cst_25 : f32 to vector<2x1xf32>
    %44 = arith.subf %43, %40 : vector<2x1xf32>
    %45 = vector.broadcast %44 : vector<2x1xf32> to vector<2x32xf32>
    %46 = arith.mulf %45, %12 : vector<2x32xf32>
    %47 = arith.addf %42, %46 : vector<2x32xf32>
    %48 = vector.broadcast %10 : vector<1x32xf32> to vector<2x32xf32>
    %49 = arith.addf %47, %48 : vector<2x32xf32>
    %cst_26 = arith.constant 0.000000e+00 : f32
    %50 = vector.broadcast %cst_26 : f32 to vector<2x32xf32>
    %51 = arith.cmpf ogt, %49, %50 : vector<2x32xf32>
    %cst_27 = arith.constant 1.000000e+00 : f32
    %cst_28 = arith.constant 2.000000e-01 : f32
    %52 = vector.broadcast %cst_27 : f32 to vector<2x32xf32>
    %53 = vector.broadcast %cst_28 : f32 to vector<2x32xf32>
    %54 = arith.select %51, %52, %53 : vector<2x32xi1>, vector<2x32xf32>
    %55 = vector.broadcast %13 : vector<1x32xf32> to vector<2x32xf32>
    %56 = arith.mulf %54, %55 : vector<2x32xf32>
    %c0_29 = arith.constant 0 : index
    %c0_30 = arith.constant 0 : index
    %57 = vector.load %arg9[%c0_29, %c0_30] : memref<32x32xf32, #tpu.memory_space<vmem>>, vector<32x32xf32>
    %cst_31 = arith.constant dense<0.000000e+00> : vector<2x32xf32>
    %58 = tpu.matmul %56, %57, %cst_31 {dimension_numbers = #tpu.dot_dimension_numbers<[1], [0], [0], [1], [0, 0, 1, 1], [], []>} : vector<2x32xf32>, vector<32x32xf32>, vector<2x32xf32> -> vector<2x32xf32>
    %59 = arith.mulf %58, %56 : vector<2x32xf32>
    %cst_32 = arith.constant dense<0.000000e+00> : vector<2xf32>
    %60 = vector.multi_reduction <add>, %59, %cst_32 [1] : vector<2x32xf32> to vector<2xf32>
    %61 = vector.shape_cast %60 : vector<2xf32> to vector<2x1xf32>
    %cst_33 = arith.constant 9.99999996E-13 : f32
    %62 = vector.broadcast %cst_33 : f32 to vector<2x1xf32>
    %63 = arith.addf %61, %62 : vector<2x1xf32>
    %64 = math.sqrt %63 : vector<2x1xf32>
    %cst_34 = arith.constant 1.000000e+00 : f32
    %65 = vector.broadcast %cst_34 : f32 to vector<2x1xf32>
    %66 = arith.subf %64, %65 : vector<2x1xf32>
    %67 = arith.mulf %66, %66 : vector<2x1xf32>
    %68 = arith.subf %39, %26 : vector<2x1xf32>
    %cst_35 = arith.constant dense<0.000000e+00> : vector<1xf32>
    %69 = vector.multi_reduction <add>, %68, %cst_35 [0] : vector<2x1xf32> to vector<1xf32>
    %70 = vector.shape_cast %69 : vector<1xf32> to vector<1x1xf32>
    %cst_36 = arith.constant dense<0.000000e+00> : vector<1xf32>
    %71 = vector.multi_reduction <add>, %67, %cst_36 [0] : vector<2x1xf32> to vector<1xf32>
    %72 = vector.shape_cast %71 : vector<1xf32> to vector<1x1xf32>
    %cst_37 = arith.constant 1.000000e+01 : f32
    %73 = vector.broadcast %cst_37 : f32 to vector<1x1xf32>
    %74 = arith.mulf %73, %72 : vector<1x1xf32>
    %75 = arith.addf %70, %74 : vector<1x1xf32>
    %cst_38 = arith.constant 5.000000e-01 : f32
    %76 = vector.broadcast %cst_38 : f32 to vector<1x1xf32>
    %77 = arith.mulf %76, %75 : vector<1x1xf32>
    %c0_39 = arith.constant 0 : index
    %c0_40 = arith.constant 0 : index
    %78 = vector.load %arg11[%c0_39, %c0_40] : memref<1x1xf32, #tpu.memory_space<vmem>>, vector<1x1xf32>
    tpu.vector_store %arg11[%c0_39, %c0_40], %77 {strides = array<i32>} : memref<1x1xf32, #tpu.memory_space<vmem>>, vector<1x1xf32>,
    return
  }
  func.func @transform_0(%arg0: i32) -> (i32, i32) {
    %c0_i32 = arith.constant 0 : i32
    %c0_i32_0 = arith.constant 0 : i32
    %c0_i32_1 = arith.constant 0 : i32
    return %c0_i32, %c0_i32_0 : i32, i32
  }
  func.func @transform_1(%arg0: i32) -> (i32, i32) {
    %c0_i32 = arith.constant 0 : i32
    %c0_i32_0 = arith.constant 0 : i32
    %c0_i32_1 = arith.constant 0 : i32
    return %c0_i32, %c0_i32_0 : i32, i32
  }
  func.func @transform_2(%arg0: i32) -> (i32, i32) {
    %c0_i32 = arith.constant 0 : i32
    %c0_i32_0 = arith.constant 0 : i32
    %c0_i32_1 = arith.constant 0 : i32
    return %c0_i32, %c0_i32_0 : i32, i32
  }
  func.func @transform_3(%arg0: i32) -> (i32, i32) {
    %c0_i32 = arith.constant 0 : i32
    %c0_i32_0 = arith.constant 0 : i32
    %c0_i32_1 = arith.constant 0 : i32
    return %c0_i32, %c0_i32_0 : i32, i32
  }
  func.func @transform_4(%arg0: i32) -> (i32, i32) {
    %c0_i32 = arith.constant 0 : i32
    %c0_i32_0 = arith.constant 0 : i32
    %c0_i32_1 = arith.constant 0 : i32
    return %c0_i32, %c0_i32_0 : i32, i32
  }
  func.func @transform_5(%arg0: i32) -> (i32, i32) {
    %c0_i32 = arith.constant 0 : i32
    %c0_i32_0 = arith.constant 0 : i32
    %c0_i32_1 = arith.constant 0 : i32
    return %c0_i32, %c0_i32_0 : i32, i32
  }
  func.func @transform_6(%arg0: i32) -> (i32, i32) {
    %c0_i32 = arith.constant 0 : i32
    %c0_i32_0 = arith.constant 0 : i32
    %c0_i32_1 = arith.constant 0 : i32
    return %c0_i32, %c0_i32_0 : i32, i32
  }
  func.func @transform_7(%arg0: i32) -> (i32, i32) {
    %c0_i32 = arith.constant 0 : i32
    %c0_i32_0 = arith.constant 0 : i32
    %c0_i32_1 = arith.constant 0 : i32
    return %c0_i32, %c0_i32_0 : i32, i32
  }
  func.func @transform_8(%arg0: i32) -> (i32, i32) {
    %c0_i32 = arith.constant 0 : i32
    %c0_i32_0 = arith.constant 0 : i32
    %c0_i32_1 = arith.constant 0 : i32
    return %c0_i32, %c0_i32_0 : i32, i32
  }
  func.func @transform_9(%arg0: i32) -> (i32, i32) {
    %c0_i32 = arith.constant 0 : i32
    %c0_i32_0 = arith.constant 0 : i32
    %c0_i32_1 = arith.constant 0 : i32
    return %c0_i32, %c0_i32_0 : i32, i32
  }
  func.func @transform_10(%arg0: i32) -> (i32, i32) {
    %c0_i32 = arith.constant 0 : i32
    %c0_i32_0 = arith.constant 0 : i32
    %c0_i32_1 = arith.constant 0 : i32
    return %c0_i32, %c0_i32_0 : i32, i32
  }
}

</mosaic_0001>

<llo_original>
// kernel: tpu_custom_call.1
$region0: #{tpu_custom_call.1}
  #allocation0 [shape = 'u32[]', space=smem, size = 0x4, offset = 0x4, fixed_abs, tag = 'smem constant byte address 0x4 - core index']
  #allocation1 [shape = 'u32[144,128]{1,0:T(1,128)}', space=vmem, size = 0x12000, scoped, tag = 'internal scratch']
  #allocation2 [shape = 'f32[1,1]{1,0:T(1,128)S(6)}', space=smem, size = 0x200, scoped, tag = 'scoped memory for tpu_custom_call.1']
  %s0 = inlined_call_operand.vmem [shape: f32[2,8], index: 0, kind: input, shape index: {}]
  %s1 = inlined_call_operand.vmem [shape: f32[8,1024], index: 1, kind: input, shape index: {}]
  %s2 = inlined_call_operand.vmem [shape: f32[1,1024], index: 2, kind: input, shape index: {}]
  %s3 = inlined_call_operand.vmem [shape: f32[2,1024], index: 3, kind: input, shape index: {}]
  %s4 = inlined_call_operand.vmem [shape: f32[2,1], index: 4, kind: input, shape index: {}]
  %s5 = inlined_call_operand.vmem [shape: f32[1024,32], index: 5, kind: input, shape index: {}]
  %s6 = inlined_call_operand.vmem [shape: f32[1,32], index: 6, kind: input, shape index: {}]
  %s7 = inlined_call_operand.vmem [shape: f32[1,32], index: 7, kind: input, shape index: {}]
  %s8 = inlined_call_operand.vmem [shape: f32[32,32], index: 8, kind: input, shape index: {}]
  %s9 = inlined_call_operand.<no memory space> [shape: f32[1,1], index: 9, kind: input, shape index: {}]
  %s10 = inlined_call_operand.hbm [shape: f32[1,1], index: 10, kind: output, shape index: {}]
  %s11 = sld [smem:[#allocation0]]
  $region50: #{tpu_custom_call.1} parent=0
    _
  %s13 = ssub.s32 1, %s11
  %s14 = scalar_select 0, %s13, %s11
  %15 = sst [smem:[#allocation2]] %s9
  $region1: #{tpu_custom_call.1} parent=0
    #allocation3 [shape = 'u8[512]{0}', space=vmem, size = 0x400, scoped, tag = 'output window, operand 0, single buffered']
    #allocation4 [shape = 's32[1]{0}', space=sflag, size = 0x4, scoped, tag = 'scoped memory for tpu_custom_call.1']
    %16 = vsyncpa [#allocation4], 0
    // Predicated region
    $region2: #{tpu_custom_call.1} parent=1 // pred_check
      _
    $region3: #{tpu_custom_call.1} parent=1 // pred_check_branch
      %18 = sbr.rel (0) target = $region5
    $region4: #{tpu_custom_call.1} parent=1 // pred_region
      _
    $region5: #{tpu_custom_call.1} parent=1 // pred_fallthru
      _
    // Predicated region
    $region6: #{tpu_custom_call.1} parent=1 // pred_check
      _
    $region7: #{tpu_custom_call.1} parent=1 // pred_check_branch
      %20 = sbr.rel (0) target = $region9
    $region8: #{tpu_custom_call.1} parent=1 // pred_region
      _
    $region9: #{tpu_custom_call.1} parent=1 // pred_fallthru
      _
    // Predicated region
    $region10: #{tpu_custom_call.1} parent=1 // pred_check
      _
    $region11: #{tpu_custom_call.1} parent=1 // pred_check_branch
      %22 = sbr.rel (0) target = $region13
    $region12: #{tpu_custom_call.1} parent=1 // pred_region
      _
    $region13: #{tpu_custom_call.1} parent=1 // pred_fallthru
      _
    // Predicated region
    $region14: #{tpu_custom_call.1} parent=1 // pred_check
      _
    $region15: #{tpu_custom_call.1} parent=1 // pred_check_branch
      %24 = sbr.rel (0) target = $region17
    $region16: #{tpu_custom_call.1} parent=1 // pred_region
      _
    $region17: #{tpu_custom_call.1} parent=1 // pred_fallthru
      _
    // Predicated region
    $region18: #{tpu_custom_call.1} parent=1 // pred_check
      _
    $region19: #{tpu_custom_call.1} parent=1 // pred_check_branch
      %26 = sbr.rel (0) target = $region21
    $region20: #{tpu_custom_call.1} parent=1 // pred_region
      _
    $region21: #{tpu_custom_call.1} parent=1 // pred_fallthru
      _
    // Predicated region
    $region22: #{tpu_custom_call.1} parent=1 // pred_check
      _
    $region23: #{tpu_custom_call.1} parent=1 // pred_check_branch
      %28 = sbr.rel (0) target = $region25
    $region24: #{tpu_custom_call.1} parent=1 // pred_region
      _
    $region25: #{tpu_custom_call.1} parent=1 // pred_fallthru
      _
    // Predicated region
    $region26: #{tpu_custom_call.1} parent=1 // pred_check
      _
    $region27: #{tpu_custom_call.1} parent=1 // pred_check_branch
      %30 = sbr.rel (0) target = $region29
    $region28: #{tpu_custom_call.1} parent=1 // pred_region
      _
    $region29: #{tpu_custom_call.1} parent=1 // pred_fallthru
      _
    // Predicated region
    $region30: #{tpu_custom_call.1} parent=1 // pred_check
      _
    $region31: #{tpu_custom_call.1} parent=1 // pred_check_branch
      %32 = sbr.rel (0) target = $region33
    $region32: #{tpu_custom_call.1} parent=1 // pred_region
      _
    $region33: #{tpu_custom_call.1} parent=1 // pred_fallthru
      _
    // Predicated region
    $region34: #{tpu_custom_call.1} parent=1 // pred_check
      _
    $region35: #{tpu_custom_call.1} parent=1 // pred_check_branch
      %34 = sbr.rel (0) target = $region37
    $region36: #{tpu_custom_call.1} parent=1 // pred_region
      _
    $region37: #{tpu_custom_call.1} parent=1 // pred_fallthru
      _
    // Predicated region
    $region38: #{tpu_custom_call.1} parent=1 // pred_check
      _
    $region39: #{tpu_custom_call.1} parent=1 // pred_check_branch
      %36 = sbr.rel (0) target = $region41
    $region40: #{tpu_custom_call.1} parent=1 // pred_region
      _
    $region41: #{tpu_custom_call.1} parent=1 // pred_fallthru
      _
    %s37 = sld [smem:[#allocation2]]
    %v38 = vld [vmem:[%s3] sm:$0xff]
    %v39 = vld [vmem:[%s3 + $0x8] sm:$0xff]
    %v40 = vld [vmem:[%s0] sm:$0x3]
    %v41 = vld [vmem:[%s1] sm:$0xff]
    %v42 = vld [vmem:[%s1 + $0x8] sm:$0xff]
    %v43 = vld [vmem:[%s1 + $0x10] sm:$0xff]
    %v44 = vld [vmem:[%s1 + $0x18] sm:$0xff]
    %v45 = vld [vmem:[%s1 + $0x20] sm:$0xff]
    %v46 = vld [vmem:[%s1 + $0x28] sm:$0xff]
    %v47 = vld [vmem:[%s1 + $0x30] sm:$0xff]
    %v48 = vld [vmem:[%s1 + $0x38] sm:$0xff]
    %v49 = vld [vmem:[%s2] sm:$0xff]
    %v51 = vlaneseq
    %v52 = vshrl.u32 %v51, 7
    %v53 = vsub.s32 0, %v52
    %v54 = vrot.slane %v49, %v53
    %v55 = vlaneseq
    %v56 = vshrl.u32 %v55, 7
    %v57 = vsub.s32 1, %v56
    %v58 = vrot.slane %v49, %v57
    %v59 = vlaneseq
    %v60 = vshrl.u32 %v59, 7
    %v61 = vsub.s32 2, %v60
    %v62 = vrot.slane %v49, %v61
    %v63 = vlaneseq
    %v64 = vshrl.u32 %v63, 7
    %v65 = vsub.s32 3, %v64
    %v66 = vrot.slane %v49, %v65
    %v67 = vlaneseq
    %v68 = vshrl.u32 %v67, 7
    %v69 = vsub.s32 4, %v68
    %v70 = vrot.slane %v49, %v69
    %v71 = vlaneseq
    %v72 = vshrl.u32 %v71, 7
    %v73 = vsub.s32 5, %v72
    %v74 = vrot.slane %v49, %v73
    %v75 = vlaneseq
    %v76 = vshrl.u32 %v75, 7
    %v77 = vsub.s32 6, %v76
    %v78 = vrot.slane %v49, %v77
    %v79 = vlaneseq
    %v80 = vshrl.u32 %v79, 7
    %v81 = vsub.s32 7, %v80
    %v82 = vrot.slane %v49, %v81
    %vm91 = vcmask 64512
    %v93 = vsel %vm91, %v40, 0
    %95 = vmatprep.subr.mxu0 %v42
    %96 = vmatpush1.msra.mxu0 %v41
    %97 = vmatprep.subr.mxu0 0.0
    %98 = vmatpush1.msra.mxu0 0.0
    %99 = vmatprep.subr.mxu0 0.0
    %100 = vmatpush1.msra.mxu0 0.0
    %101 = vmatprep.subr.mxu0 0.0
    %102 = vmatpush1.msra.mxu0 0.0
    %103 = vmatprep.subr.mxu0 0.0
    %104 = vmatpush1.msra.mxu0 0.0
    %105 = vmatprep.subr.mxu0 0.0
    %106 = vmatpush1.msra.mxu0 0.0
    %107 = vmatprep.subr.mxu0 0.0
    %108 = vmatpush1.msra.mxu0 0.0
    %109 = vmatprep.subr.mxu0 0.0
    %110 = vmatpush1.msra.mxu0 0.0
    %111 = vmatprep.subr.mxu0 0.0
    %112 = vmatpush1.msra.mxu0 0.0
    %113 = vmatprep.subr.mxu0 0.0
    %114 = vmatpush1.msra.mxu0 0.0
    %115 = vmatprep.subr.mxu0 0.0
    %116 = vmatpush1.msra.mxu0 0.0
    %117 = vmatprep.subr.mxu0 0.0
    %118 = vmatpush1.msra.mxu0 0.0
    %119 = vmatprep.subr.mxu0 0.0
    %120 = vmatpush1.msra.mxu0 0.0
    %121 = vmatprep.subr.mxu0 0.0
    %122 = vmatpush1.msra.mxu0 0.0
    %123 = vmatprep.subr.mxu0 0.0
    %124 = vmatpush1.msra.mxu0 0.0
    %125 = vmatprep.subr.mxu0 0.0
    %126 = vmatpush1.msra.mxu0 0.0
    %127 = vmatprep.subr.mxu0 0.0
    %128 = vmatpush1.msra.mxu0 0.0
    %129 = vmatprep.subr.mxu0 0.0
    %130 = vmatpush1.msra.mxu0 0.0
    %131 = vmatprep.subr.mxu0 0.0
    %132 = vmatpush1.msra.mxu0 0.0
    %133 = vmatprep.subr.mxu0 0.0
    %134 = vmatpush1.msra.mxu0 0.0
    %135 = vmatprep.subr.mxu0 0.0
    %136 = vmatpush1.msra.mxu0 0.0
    %137 = vmatprep.subr.mxu0 0.0
    %138 = vmatpush1.msra.mxu0 0.0
    %139 = vmatprep.subr.mxu0 0.0
    %140 = vmatpush1.msra.mxu0 0.0
    %141 = vmatprep.subr.mxu0 0.0
    %142 = vmatpush1.msra.mxu0 0.0
    %143 = vmatprep.subr.mxu0 0.0
    %144 = vmatpush1.msra.mxu0 0.0
    %145 = vmatprep.subr.mxu0 0.0
    %146 = vmatpush1.msra.mxu0 0.0
    %147 = vmatprep.subr.mxu0 0.0
    %148 = vmatpush1.msra.mxu0 0.0
    %149 = vmatprep.subr.mxu0 0.0
    %150 = vmatpush1.msra.mxu0 0.0
    %151 = vmatprep.subr.mxu0 0.0
    %152 = vmatpush1.msra.mxu0 0.0
    %153 = vmatprep.subr.mxu0 0.0
    %154 = vmatpush1.msra.mxu0 0.0
    %155 = vmatprep.subr.mxu0 0.0
    %156 = vmatpush1.msra.mxu0 0.0
    %157 = vmatprep.subr.mxu0 0.0
    %158 = vmatpush1.msra.mxu0 0.0
    %159 = vmatprep.mubr.f32.mxu0 0.0
    %160 = vmatmul.mubr.f32.gmra.mrb[0].mxu0 %v93
    %v161 = vpop.f32.mrb[0].mxu0
    %v162 = vadd.f32 %v54, %v161
    %v163 = vpop.f32.mrb[0].mxu0
    %v164 = vadd.f32 %v58, %v163
    %165 = vdwg.mxu0
    %166 = vmatprep.subr.mxu0 %v44
    %167 = vmatpush1.msra.mxu0 %v43
    %168 = vmatprep.subr.mxu0 0.0
    %169 = vmatpush1.msra.mxu0 0.0
    %170 = vmatprep.subr.mxu0 0.0
    %171 = vmatpush1.msra.mxu0 0.0
    %172 = vmatprep.subr.mxu0 0.0
    %173 = vmatpush1.msra.mxu0 0.0
    %174 = vmatprep.subr.mxu0 0.0
    %175 = vmatpush1.msra.mxu0 0.0
    %176 = vmatprep.subr.mxu0 0.0
    %177 = vmatpush1.msra.mxu0 0.0
    %178 = vmatprep.subr.mxu0 0.0
    %179 = vmatpush1.msra.mxu0 0.0
    %180 = vmatprep.subr.mxu0 0.0
    %181 = vmatpush1.msra.mxu0 0.0
    %182 = vmatprep.subr.mxu0 0.0
    %183 = vmatpush1.msra.mxu0 0.0
    %184 = vmatprep.subr.mxu0 0.0
    %185 = vmatpush1.msra.mxu0 0.0
    %186 = vmatprep.subr.mxu0 0.0
    %187 = vmatpush1.msra.mxu0 0.0
    %188 = vmatprep.subr.mxu0 0.0
    %189 = vmatpush1.msra.mxu0 0.0
    %190 = vmatprep.subr.mxu0 0.0
    %191 = vmatpush1.msra.mxu0 0.0
    %192 = vmatprep.subr.mxu0 0.0
    %193 = vmatpush1.msra.mxu0 0.0
    %194 = vmatprep.subr.mxu0 0.0
    %195 = vmatpush1.msra.mxu0 0.0
    %196 = vmatprep.subr.mxu0 0.0
    %197 = vmatpush1.msra.mxu0 0.0
    %198 = vmatprep.subr.mxu0 0.0
    %199 = vmatpush1.msra.mxu0 0.0
    %200 = vmatprep.subr.mxu0 0.0
    %201 = vmatpush1.msra.mxu0 0.0
    %202 = vmatprep.subr.mxu0 0.0
    %203 = vmatpush1.msra.mxu0 0.0
    %204 = vmatprep.subr.mxu0 0.0
    %205 = vmatpush1.msra.mxu0 0.0
    %206 = vmatprep.subr.mxu0 0.0
    %207 = vmatpush1.msra.mxu0 0.0
    %208 = vmatprep.subr.mxu0 0.0
    %209 = vmatpush1.msra.mxu0 0.0
    %210 = vmatprep.subr.mxu0 0.0
    %211 = vmatpush1.msra.mxu0 0.0
    %212 = vmatprep.subr.mxu0 0.0
    %213 = vmatpush1.msra.mxu0 0.0
    %214 = vmatprep.subr.mxu0 0.0
    %215 = vmatpush1.msra.mxu0 0.0
    %216 = vmatprep.subr.mxu0 0.0
    %217 = vmatpush1.msra.mxu0 0.0
    %218 = vmatprep.subr.mxu0 0.0
    %219 = vmatpush1.msra.mxu0 0.0
    %220 = vmatprep.subr.mxu0 0.0
    %221 = vmatpush1.msra.mxu0 0.0
    %222 = vmatprep.subr.mxu0 0.0
    %223 = vmatpush1.msra.mxu0 0.0
    %224 = vmatprep.subr.mxu0 0.0
    %225 = vmatpush1.msra.mxu0 0.0
    %226 = vmatprep.subr.mxu0 0.0
    %227 = vmatpush1.msra.mxu0 0.0
    %228 = vmatprep.subr.mxu0 0.0
    %229 = vmatpush1.msra.mxu0 0.0
    %230 = vmatprep.mubr.f32.mxu0 0.0
    %231 = vmatmul.mubr.f32.gmra.mrb[0].mxu0 %v93
    %v232 = vpop.f32.mrb[0].mxu0
    %v233 = vadd.f32 %v62, %v232
    %v234 = vpop.f32.mrb[0].mxu0
    %v235 = vadd.f32 %v66, %v234
    %236 = vdwg.mxu0
    %237 = vmatprep.subr.mxu0 %v46
    %238 = vmatpush1.msra.mxu0 %v45
    %239 = vmatprep.subr.mxu0 0.0
    %240 = vmatpush1.msra.mxu0 0.0
    %241 = vmatprep.subr.mxu0 0.0
    %242 = vmatpush1.msra.mxu0 0.0
    %243 = vmatprep.subr.mxu0 0.0
    %244 = vmatpush1.msra.mxu0 0.0
    %245 = vmatprep.subr.mxu0 0.0
    %246 = vmatpush1.msra.mxu0 0.0
    %247 = vmatprep.subr.mxu0 0.0
    %248 = vmatpush1.msra.mxu0 0.0
    %249 = vmatprep.subr.mxu0 0.0
    %250 = vmatpush1.msra.mxu0 0.0
    %251 = vmatprep.subr.mxu0 0.0
    %252 = vmatpush1.msra.mxu0 0.0
    %253 = vmatprep.subr.mxu0 0.0
    %254 = vmatpush1.msra.mxu0 0.0
    %255 = vmatprep.subr.mxu0 0.0
    %256 = vmatpush1.msra.mxu0 0.0
    %257 = vmatprep.subr.mxu0 0.0
    %258 = vmatpush1.msra.mxu0 0.0
    %259 = vmatprep.subr.mxu0 0.0
    %260 = vmatpush1.msra.mxu0 0.0
    %261 = vmatprep.subr.mxu0 0.0
    %262 = vmatpush1.msra.mxu0 0.0
    %263 = vmatprep.subr.mxu0 0.0
    %264 = vmatpush1.msra.mxu0 0.0
    %265 = vmatprep.subr.mxu0 0.0
    %266 = vmatpush1.msra.mxu0 0.0
    %267 = vmatprep.subr.mxu0 0.0
    %268 = vmatpush1.msra.mxu0 0.0
    %269 = vmatprep.subr.mxu0 0.0
    %270 = vmatpush1.msra.mxu0 0.0
    %271 = vmatprep.subr.mxu0 0.0
    %272 = vmatpush1.msra.mxu0 0.0
    %273 = vmatprep.subr.mxu0 0.0
    %274 = vmatpush1.msra.mxu0 0.0
    %275 = vmatprep.subr.mxu0 0.0
    %276 = vmatpush1.msra.mxu0 0.0
    %277 = vmatprep.subr.mxu0 0.0
    %278 = vmatpush1.msra.mxu0 0.0
    %279 = vmatprep.subr.mxu0 0.0
    %280 = vmatpush1.msra.mxu0 0.0
    %281 = vmatprep.subr.mxu0 0.0
    %282 = vmatpush1.msra.mxu0 0.0
    %283 = vmatprep.subr.mxu0 0.0
    %284 = vmatpush1.msra.mxu0 0.0
    %285 = vmatprep.subr.mxu0 0.0
    %286 = vmatpush1.msra.mxu0 0.0
    %287 = vmatprep.subr.mxu0 0.0
    %288 = vmatpush1.msra.mxu0 0.0
    %289 = vmatprep.subr.mxu0 0.0
    %290 = vmatpush1.msra.mxu0 0.0
    %291 = vmatprep.subr.mxu0 0.0
    %292 = vmatpush1.msra.mxu0 0.0
    %293 = vmatprep.subr.mxu0 0.0
    %294 = vmatpush1.msra.mxu0 0.0
    %295 = vmatprep.subr.mxu0 0.0
    %296 = vmatpush1.msra.mxu0 0.0
    %297 = vmatprep.subr.mxu0 0.0
    %298 = vmatpush1.msra.mxu0 0.0
    %299 = vmatprep.subr.mxu0 0.0
    %300 = vmatpush1.msra.mxu0 0.0
    %301 = vmatprep.mubr.f32.mxu0 0.0
    %302 = vmatmul.mubr.f32.gmra.mrb[0].mxu0 %v93
    %v303 = vpop.f32.mrb[0].mxu0
    %v304 = vadd.f32 %v70, %v303
    %v305 = vpop.f32.mrb[0].mxu0
    %v306 = vadd.f32 %v74, %v305
    %307 = vdwg.mxu0
    %308 = vmatprep.subr.mxu0 %v48
    %309 = vmatpush1.msra.mxu0 %v47
    %310 = vmatprep.subr.mxu0 0.0
    %311 = vmatpush1.msra.mxu0 0.0
    %312 = vmatprep.subr.mxu0 0.0
    %313 = vmatpush1.msra.mxu0 0.0
    %314 = vmatprep.subr.mxu0 0.0
    %315 = vmatpush1.msra.mxu0 0.0
    %316 = vmatprep.subr.mxu0 0.0
    %317 = vmatpush1.msra.mxu0 0.0
    %318 = vmatprep.subr.mxu0 0.0
    %319 = vmatpush1.msra.mxu0 0.0
    %320 = vmatprep.subr.mxu0 0.0
    %321 = vmatpush1.msra.mxu0 0.0
    %322 = vmatprep.subr.mxu0 0.0
    %323 = vmatpush1.msra.mxu0 0.0
    %324 = vmatprep.subr.mxu0 0.0
    %325 = vmatpush1.msra.mxu0 0.0
    %326 = vmatprep.subr.mxu0 0.0
    %327 = vmatpush1.msra.mxu0 0.0
    %328 = vmatprep.subr.mxu0 0.0
    %329 = vmatpush1.msra.mxu0 0.0
    %330 = vmatprep.subr.mxu0 0.0
    %331 = vmatpush1.msra.mxu0 0.0
    %332 = vmatprep.subr.mxu0 0.0
    %333 = vmatpush1.msra.mxu0 0.0
    %334 = vmatprep.subr.mxu0 0.0
    %335 = vmatpush1.msra.mxu0 0.0
    %336 = vmatprep.subr.mxu0 0.0
    %337 = vmatpush1.msra.mxu0 0.0
    %338 = vmatprep.subr.mxu0 0.0
    %339 = vmatpush1.msra.mxu0 0.0
    %340 = vmatprep.subr.mxu0 0.0
    %341 = vmatpush1.msra.mxu0 0.0
    %342 = vmatprep.subr.mxu0 0.0
    %343 = vmatpush1.msra.mxu0 0.0
    %344 = vmatprep.subr.mxu0 0.0
    %345 = vmatpush1.msra.mxu0 0.0
    %346 = vmatprep.subr.mxu0 0.0
    %347 = vmatpush1.msra.mxu0 0.0
    %348 = vmatprep.subr.mxu0 0.0
    %349 = vmatpush1.msra.mxu0 0.0
    %350 = vmatprep.subr.mxu0 0.0
    %351 = vmatpush1.msra.mxu0 0.0
    %352 = vmatprep.subr.mxu0 0.0
    %353 = vmatpush1.msra.mxu0 0.0
    %354 = vmatprep.subr.mxu0 0.0
    %355 = vmatpush1.msra.mxu0 0.0
    %356 = vmatprep.subr.mxu0 0.0
    %357 = vmatpush1.msra.mxu0 0.0
    %358 = vmatprep.subr.mxu0 0.0
    %359 = vmatpush1.msra.mxu0 0.0
    %360 = vmatprep.subr.mxu0 0.0
    %361 = vmatpush1.msra.mxu0 0.0
    %362 = vmatprep.subr.mxu0 0.0
    %363 = vmatpush1.msra.mxu0 0.0
    %364 = vmatprep.subr.mxu0 0.0
    %365 = vmatpush1.msra.mxu0 0.0
    %366 = vmatprep.subr.mxu0 0.0
    %367 = vmatpush1.msra.mxu0 0.0
    %368 = vmatprep.subr.mxu0 0.0
    %369 = vmatpush1.msra.mxu0 0.0
    %370 = vmatprep.subr.mxu0 0.0
    %371 = vmatpush1.msra.mxu0 0.0
    %372 = vmatprep.mubr.f32.mxu0 0.0
    %373 = vmatmul.mubr.f32.gmra.mrb[0].mxu0 %v93
    %v374 = vpop.f32.mrb[0].mxu0
    %v375 = vadd.f32 %v78, %v374
    %v376 = vpop.f32.mrb[0].mxu0
    %v377 = vadd.f32 %v82, %v376
    %378 = vdwg.mxu0
    %v379 = vtanh.pop %v162
    %v380 = vtanh.pop %v164
    %v381 = vtanh.pop %v233
    %v382 = vtanh.pop %v235
    %v383 = vtanh.pop %v304
    %v384 = vtanh.pop %v306
    %v385 = vtanh.pop %v375
    %v386 = vtanh.pop %v377
    %v387 = vld [vmem:[%s5] sm:$0xff]
    %v388 = vld [vmem:[%s5 + $0x8] sm:$0xff]
    %v389 = vld [vmem:[%s5 + $0x10] sm:$0xff]
    %v390 = vld [vmem:[%s5 + $0x18] sm:$0xff]
    %v391 = vld [vmem:[%s5 + $0x20] sm:$0xff]
    %v392 = vld [vmem:[%s5 + $0x28] sm:$0xff]
    %v393 = vld [vmem:[%s5 + $0x30] sm:$0xff]
    %v394 = vld [vmem:[%s5 + $0x38] sm:$0xff]
    %v395 = vld [vmem:[%s5 + $0x40] sm:$0xff]
    %v396 = vld [vmem:[%s5 + $0x48] sm:$0xff]
    %v397 = vld [vmem:[%s5 + $0x50] sm:$0xff]
    %v398 = vld [vmem:[%s5 + $0x58] sm:$0xff]
    %v399 = vld [vmem:[%s5 + $0x60] sm:$0xff]
    %v400 = vld [vmem:[%s5 + $0x68] sm:$0xff]
    %v401 = vld [vmem:[%s5 + $0x70] sm:$0xff]
    %v402 = vld [vmem:[%s5 + $0x78] sm:$0xff]
    %v403 = vld [vmem:[%s5 + $0x80] sm:$0xff]
    %v404 = vld [vmem:[%s5 + $0x88] sm:$0xff]
    %v405 = vld [vmem:[%s5 + $0x90] sm:$0xff]
    %v406 = vld [vmem:[%s5 + $0x98] sm:$0xff]
    %v407 = vld [vmem:[%s5 + $0xa0] sm:$0xff]
    %v408 = vld [vmem:[%s5 + $0xa8] sm:$0xff]
    %v409 = vld [vmem:[%s5 + $0xb0] sm:$0xff]
    %v410 = vld [vmem:[%s5 + $0xb8] sm:$0xff]
    %v411 = vld [vmem:[%s5 + $0xc0] sm:$0xff]
    %v412 = vld [vmem:[%s5 + $0xc8] sm:$0xff]
    %v413 = vld [vmem:[%s5 + $0xd0] sm:$0xff]
    %v414 = vld [vmem:[%s5 + $0xd8] sm:$0xff]
    %v415 = vld [vmem:[%s5 + $0xe0] sm:$0xff]
    %v416 = vld [vmem:[%s5 + $0xe8] sm:$0xff]
    %v417 = vld [vmem:[%s5 + $0xf0] sm:$0xff]
    %v418 = vld [vmem:[%s5 + $0xf8] sm:$0xff]
    %v419 = vld [vmem:[%s5 + $0x100] sm:$0xff]
    %v420 = vld [vmem:[%s5 + $0x108] sm:$0xff]
    %v421 = vld [vmem:[%s5 + $0x110] sm:$0xff]
    %v422 = vld [vmem:[%s5 + $0x118] sm:$0xff]
    %v423 = vld [vmem:[%s5 + $0x120] sm:$0xff]
    %v424 = vld [vmem:[%s5 + $0x128] sm:$0xff]
    %v425 = vld [vmem:[%s5 + $0x130] sm:$0xff]
    %v426 = vld [vmem:[%s5 + $0x138] sm:$0xff]
    %v427 = vld [vmem:[%s5 + $0x140] sm:$0xff]
    %v428 = vld [vmem:[%s5 + $0x148] sm:$0xff]
    %v429 = vld [vmem:[%s5 + $0x150] sm:$0xff]
    %v430 = vld [vmem:[%s5 + $0x158] sm:$0xff]
    %v431 = vld [vmem:[%s5 + $0x160] sm:$0xff]
    %v432 = vld [vmem:[%s5 + $0x168] sm:$0xff]
    %v433 = vld [vmem:[%s5 + $0x170] sm:$0xff]
    %v434 = vld [vmem:[%s5 + $0x178] sm:$0xff]
    %v435 = vld [vmem:[%s5 + $0x180] sm:$0xff]
    %v436 = vld [vmem:[%s5 + $0x188] sm:$0xff]
    %v437 = vld [vmem:[%s5 + $0x190] sm:$0xff]
    %v438 = vld [vmem:[%s5 + $0x198] sm:$0xff]
    %v439 = vld [vmem:[%s5 + $0x1a0] sm:$0xff]
    %v440 = vld [vmem:[%s5 + $0x1a8] sm:$0xff]
    %v441 = vld [vmem:[%s5 + $0x1b0] sm:$0xff]
    %v442 = vld [vmem:[%s5 + $0x1b8] sm:$0xff]
    %v443 = vld [vmem:[%s5 + $0x1c0] sm:$0xff]
    %v444 = vld [vmem:[%s5 + $0x1c8] sm:$0xff]
    %v445 = vld [vmem:[%s5 + $0x1d0] sm:$0xff]
    %v446 = vld [vmem:[%s5 + $0x1d8] sm:$0xff]
    %v447 = vld [vmem:[%s5 + $0x1e0] sm:$0xff]
    %v448 = vld [vmem:[%s5 + $0x1e8] sm:$0xff]
    %v449 = vld [vmem:[%s5 + $0x1f0] sm:$0xff]
    %v450 = vld [vmem:[%s5 + $0x1f8] sm:$0xff]
    %v451 = vld [vmem:[%s5 + $0x200] sm:$0xff]
    %v452 = vld [vmem:[%s5 + $0x208] sm:$0xff]
    %v453 = vld [vmem:[%s5 + $0x210] sm:$0xff]
    %v454 = vld [vmem:[%s5 + $0x218] sm:$0xff]
    %v455 = vld [vmem:[%s5 + $0x220] sm:$0xff]
    %v456 = vld [vmem:[%s5 + $0x228] sm:$0xff]
    %v457 = vld [vmem:[%s5 + $0x230] sm:$0xff]
    %v458 = vld [vmem:[%s5 + $0x238] sm:$0xff]
    %v459 = vld [vmem:[%s5 + $0x240] sm:$0xff]
    %v460 = vld [vmem:[%s5 + $0x248] sm:$0xff]
    %v461 = vld [vmem:[%s5 + $0x250] sm:$0xff]
    %v462 = vld [vmem:[%s5 + $0x258] sm:$0xff]
    %v463 = vld [vmem:[%s5 + $0x260] sm:$0xff]
    %v464 = vld [vmem:[%s5 + $0x268] sm:$0xff]
    %v465 = vld [vmem:[%s5 + $0x270] sm:$0xff]
    %v466 = vld [vmem:[%s5 + $0x278] sm:$0xff]
    %v467 = vld [vmem:[%s5 + $0x280] sm:$0xff]
    %v468 = vld [vmem:[%s5 + $0x288] sm:$0xff]
    %v469 = vld [vmem:[%s5 + $0x290] sm:$0xff]
    %v470 = vld [vmem:[%s5 + $0x298] sm:$0xff]
    %v471 = vld [vmem:[%s5 + $0x2a0] sm:$0xff]
    %v472 = vld [vmem:[%s5 + $0x2a8] sm:$0xff]
    %v473 = vld [vmem:[%s5 + $0x2b0] sm:$0xff]
    %v474 = vld [vmem:[%s5 + $0x2b8] sm:$0xff]
    %v475 = vld [vmem:[%s5 + $0x2c0] sm:$0xff]
    %v476 = vld [vmem:[%s5 + $0x2c8] sm:$0xff]
    %v477 = vld [vmem:[%s5 + $0x2d0] sm:$0xff]
    %v478 = vld [vmem:[%s5 + $0x2d8] sm:$0xff]
    %v479 = vld [vmem:[%s5 + $0x2e0] sm:$0xff]
    %v480 = vld [vmem:[%s5 + $0x2e8] sm:$0xff]
    %v481 = vld [vmem:[%s5 + $0x2f0] sm:$0xff]
    %v482 = vld [vmem:[%s5 + $0x2f8] sm:$0xff]
    %v483 = vld [vmem:[%s5 + $0x300] sm:$0xff]
    %v484 = vld [vmem:[%s5 + $0x308] sm:$0xff]
    %v485 = vld [vmem:[%s5 + $0x310] sm:$0xff]
    %v486 = vld [vmem:[%s5 + $0x318] sm:$0xff]
    %v487 = vld [vmem:[%s5 + $0x320] sm:$0xff]
    %v488 = vld [vmem:[%s5 + $0x328] sm:$0xff]
    %v489 = vld [vmem:[%s5 + $0x330] sm:$0xff]
    %v490 = vld [vmem:[%s5 + $0x338] sm:$0xff]
    %v491 = vld [vmem:[%s5 + $0x340] sm:$0xff]
    %v492 = vld [vmem:[%s5 + $0x348] sm:$0xff]
    %v493 = vld [vmem:[%s5 + $0x350] sm:$0xff]
    %v494 = vld [vmem:[%s5 + $0x358] sm:$0xff]
    %v495 = vld [vmem:[%s5 + $0x360] sm:$0xff]
    %v496 = vld [vmem:[%s5 + $0x368] sm:$0xff]
    %v497 = vld [vmem:[%s5 + $0x370] sm:$0xff]
    %v498 = vld [vmem:[%s5 + $0x378] sm:$0xff]
    %v499 = vld [vmem:[%s5 + $0x380] sm:$0xff]
    %v500 = vld [vmem:[%s5 + $0x388] sm:$0xff]
    %v501 = vld [vmem:[%s5 + $0x390] sm:$0xff]
    %v502 = vld [vmem:[%s5 + $0x398] sm:$0xff]
    %v503 = vld [vmem:[%s5 + $0x3a0] sm:$0xff]
    %v504 = vld [vmem:[%s5 + $0x3a8] sm:$0xff]
    %v505 = vld [vmem:[%s5 + $0x3b0] sm:$0xff]
    %v506 = vld [vmem:[%s5 + $0x3b8] sm:$0xff]
    %v507 = vld [vmem:[%s5 + $0x3c0] sm:$0xff]
    %v508 = vld [vmem:[%s5 + $0x3c8] sm:$0xff]
    %v509 = vld [vmem:[%s5 + $0x3d0] sm:$0xff]
    %v510 = vld [vmem:[%s5 + $0x3d8] sm:$0xff]
    %v511 = vld [vmem:[%s5 + $0x3e0] sm:$0xff]
    %v512 = vld [vmem:[%s5 + $0x3e8] sm:$0xff]
    %v513 = vld [vmem:[%s5 + $0x3f0] sm:$0xff]
    %v514 = vld [vmem:[%s5 + $0x3f8] sm:$0xff]
    %v515 = vld [vmem:[%s6] sm:$0x1]
    %v518 = vcombine.high %v38, %v38
    %v520 = vunpack.c.l.s4 1983009808
    %v521 = vunpack.c.0.s8 %v520
    %v522 = vlaneseq
    %v523 = vshrl.u32 %v522, 7
    %v524 = vsub.s32 %v521, %v523
    %v525 = vrot.slane %v38, %v524
    %v527 = vunpack.c.l.s4 1983009808
    %v528 = vunpack.c.0.s8 %v527
    %v529 = vlaneseq
    %v530 = vshrl.u32 %v529, 7
    %v531 = vsub.s32 %v528, %v530
    %v532 = vrot.slane %v518, %v531
    %v533 = vcombine.high %v525, %v525
    %v534 = vcombine.high %v532, %v532
    %v535 = vcombine.high %v39, %v39
    %v537 = vunpack.c.l.s4 1983009808
    %v538 = vunpack.c.0.s8 %v537
    %v539 = vlaneseq
    %v540 = vshrl.u32 %v539, 7
    %v541 = vsub.s32 %v538, %v540
    %v542 = vrot.slane %v39, %v541
    %v544 = vunpack.c.l.s4 1983009808
    %v545 = vunpack.c.0.s8 %v544
    %v546 = vlaneseq
    %v547 = vshrl.u32 %v546, 7
    %v548 = vsub.s32 %v545, %v547
    %v549 = vrot.slane %v535, %v548
    %v550 = vcombine.high %v542, %v542
    %v551 = vcombine.high %v549, %v549
    %560 = vmatprep.subr.mxu0 0.0
    %561 = vmatpush1.msra.mxu0 %v387
    %562 = vmatprep.subr.mxu0 0.0
    %563 = vmatpush1.msra.mxu0 %v388
    %564 = vmatprep.subr.mxu0 0.0
    %565 = vmatpush1.msra.mxu0 %v389
    %566 = vmatprep.subr.mxu0 0.0
    %567 = vmatpush1.msra.mxu0 %v390
    %568 = vmatprep.subr.mxu0 0.0
    %569 = vmatpush1.msra.mxu0 %v391
    %570 = vmatprep.subr.mxu0 0.0
    %571 = vmatpush1.msra.mxu0 %v392
    %572 = vmatprep.subr.mxu0 0.0
    %573 = vmatpush1.msra.mxu0 %v393
    %574 = vmatprep.subr.mxu0 0.0
    %575 = vmatpush1.msra.mxu0 %v394
    %576 = vmatprep.subr.mxu0 0.0
    %577 = vmatpush1.msra.mxu0 %v395
    %578 = vmatprep.subr.mxu0 0.0
    %579 = vmatpush1.msra.mxu0 %v396
    %580 = vmatprep.subr.mxu0 0.0
    %581 = vmatpush1.msra.mxu0 %v397
    %582 = vmatprep.subr.mxu0 0.0
    %583 = vmatpush1.msra.mxu0 %v398
    %584 = vmatprep.subr.mxu0 0.0
    %585 = vmatpush1.msra.mxu0 %v399
    %586 = vmatprep.subr.mxu0 0.0
    %587 = vmatpush1.msra.mxu0 %v400
    %588 = vmatprep.subr.mxu0 0.0
    %589 = vmatpush1.msra.mxu0 %v401
    %590 = vmatprep.subr.mxu0 0.0
    %591 = vmatpush1.msra.mxu0 %v402
    %592 = vmatprep.subr.mxu0 0.0
    %593 = vmatpush1.msra.mxu0 %v403
    %594 = vmatprep.subr.mxu0 0.0
    %595 = vmatpush1.msra.mxu0 %v404
    %596 = vmatprep.subr.mxu0 0.0
    %597 = vmatpush1.msra.mxu0 %v405
    %598 = vmatprep.subr.mxu0 0.0
    %599 = vmatpush1.msra.mxu0 %v406
    %600 = vmatprep.subr.mxu0 0.0
    %601 = vmatpush1.msra.mxu0 %v407
    %602 = vmatprep.subr.mxu0 0.0
    %603 = vmatpush1.msra.mxu0 %v408
    %604 = vmatprep.subr.mxu0 0.0
    %605 = vmatpush1.msra.mxu0 %v409
    %606 = vmatprep.subr.mxu0 0.0
    %607 = vmatpush1.msra.mxu0 %v410
    %608 = vmatprep.subr.mxu0 0.0
    %609 = vmatpush1.msra.mxu0 %v411
    %610 = vmatprep.subr.mxu0 0.0
    %611 = vmatpush1.msra.mxu0 %v412
    %612 = vmatprep.subr.mxu0 0.0
    %613 = vmatpush1.msra.mxu0 %v413
    %614 = vmatprep.subr.mxu0 0.0
    %615 = vmatpush1.msra.mxu0 %v414
    %616 = vmatprep.subr.mxu0 0.0
    %617 = vmatpush1.msra.mxu0 %v415
    %618 = vmatprep.subr.mxu0 0.0
    %619 = vmatpush1.msra.mxu0 %v416
    %620 = vmatprep.subr.mxu0 0.0
    %621 = vmatpush1.msra.mxu0 %v417
    %622 = vmatprep.subr.mxu0 0.0
    %623 = vmatpush1.msra.mxu0 %v418
    %624 = vmatprep.mubr.f32.mxu0 %v533
    %625 = vmatmul.mubr.f32.gmra.mrb[0].mxu0 %v525
    %v626 = vpop.f32.mrb[0].mxu0
    %v627 = vadd.f32 0.0, %v626
    %v628 = vpop.f32.mrb[0].mxu0
    %629 = vdwg.mxu0
    %630 = vmatprep.subr.mxu0 0.0
    %631 = vmatpush1.msra.mxu0 %v419
    %632 = vmatprep.subr.mxu0 0.0
    %633 = vmatpush1.msra.mxu0 %v420
    %634 = vmatprep.subr.mxu0 0.0
    %635 = vmatpush1.msra.mxu0 %v421
    %636 = vmatprep.subr.mxu0 0.0
    %637 = vmatpush1.msra.mxu0 %v422
    %638 = vmatprep.subr.mxu0 0.0
    %639 = vmatpush1.msra.mxu0 %v423
    %640 = vmatprep.subr.mxu0 0.0
    %641 = vmatpush1.msra.mxu0 %v424
    %642 = vmatprep.subr.mxu0 0.0
    %643 = vmatpush1.msra.mxu0 %v425
    %644 = vmatprep.subr.mxu0 0.0
    %645 = vmatpush1.msra.mxu0 %v426
    %646 = vmatprep.subr.mxu0 0.0
    %647 = vmatpush1.msra.mxu0 %v427
    %648 = vmatprep.subr.mxu0 0.0
    %649 = vmatpush1.msra.mxu0 %v428
    %650 = vmatprep.subr.mxu0 0.0
    %651 = vmatpush1.msra.mxu0 %v429
    %652 = vmatprep.subr.mxu0 0.0
    %653 = vmatpush1.msra.mxu0 %v430
    %654 = vmatprep.subr.mxu0 0.0
    %655 = vmatpush1.msra.mxu0 %v431
    %656 = vmatprep.subr.mxu0 0.0
    %657 = vmatpush1.msra.mxu0 %v432
    %658 = vmatprep.subr.mxu0 0.0
    %659 = vmatpush1.msra.mxu0 %v433
    %660 = vmatprep.subr.mxu0 0.0
    %661 = vmatpush1.msra.mxu0 %v434
    %662 = vmatprep.subr.mxu0 0.0
    %663 = vmatpush1.msra.mxu0 %v435
    %664 = vmatprep.subr.mxu0 0.0
    %665 = vmatpush1.msra.mxu0 %v436
    %666 = vmatprep.subr.mxu0 0.0
    %667 = vmatpush1.msra.mxu0 %v437
    %668 = vmatprep.subr.mxu0 0.0
    %669 = vmatpush1.msra.mxu0 %v438
    %670 = vmatprep.subr.mxu0 0.0
    %671 = vmatpush1.msra.mxu0 %v439
    %672 = vmatprep.subr.mxu0 0.0
    %673 = vmatpush1.msra.mxu0 %v440
    %674 = vmatprep.subr.mxu0 0.0
    %675 = vmatpush1.msra.mxu0 %v441
    %676 = vmatprep.subr.mxu0 0.0
    %677 = vmatpush1.msra.mxu0 %v442
    %678 = vmatprep.subr.mxu0 0.0
    %679 = vmatpush1.msra.mxu0 %v443
    %680 = vmatprep.subr.mxu0 0.0
    %681 = vmatpush1.msra.mxu0 %v444
    %682 = vmatprep.subr.mxu0 0.0
    %683 = vmatpush1.msra.mxu0 %v445
    %684 = vmatprep.subr.mxu0 0.0
    %685 = vmatpush1.msra.mxu0 %v446
    %686 = vmatprep.subr.mxu0 0.0
    %687 = vmatpush1.msra.mxu0 %v447
    %688 = vmatprep.subr.mxu0 0.0
    %689 = vmatpush1.msra.mxu0 %v448
    %690 = vmatprep.subr.mxu0 0.0
    %691 = vmatpush1.msra.mxu0 %v449
    %692 = vmatprep.subr.mxu0 0.0
    %693 = vmatpush1.msra.mxu0 %v450
    %694 = vmatprep.mubr.f32.mxu0 %v534
    %695 = vmatmul.mubr.f32.gmra.mrb[0].mxu0 %v532
    %v696 = vpop.f32.mrb[0].mxu0
    %v697 = vadd.f32 %v627, %v696
    %v698 = vpop.f32.mrb[0].mxu0
    %699 = vdwg.mxu0
    %700 = vmatprep.subr.mxu0 0.0
    %701 = vmatpush1.msra.mxu0 %v451
    %702 = vmatprep.subr.mxu0 0.0
    %703 = vmatpush1.msra.mxu0 %v452
    %704 = vmatprep.subr.mxu0 0.0
    %705 = vmatpush1.msra.mxu0 %v453
    %706 = vmatprep.subr.mxu0 0.0
    %707 = vmatpush1.msra.mxu0 %v454
    %708 = vmatprep.subr.mxu0 0.0
    %709 = vmatpush1.msra.mxu0 %v455
    %710 = vmatprep.subr.mxu0 0.0
    %711 = vmatpush1.msra.mxu0 %v456
    %712 = vmatprep.subr.mxu0 0.0
    %713 = vmatpush1.msra.mxu0 %v457
    %714 = vmatprep.subr.mxu0 0.0
    %715 = vmatpush1.msra.mxu0 %v458
    %716 = vmatprep.subr.mxu0 0.0
    %717 = vmatpush1.msra.mxu0 %v459
    %718 = vmatprep.subr.mxu0 0.0
    %719 = vmatpush1.msra.mxu0 %v460
    %720 = vmatprep.subr.mxu0 0.0
    %721 = vmatpush1.msra.mxu0 %v461
    %722 = vmatprep.subr.mxu0 0.0
    %723 = vmatpush1.msra.mxu0 %v462
    %724 = vmatprep.subr.mxu0 0.0
    %725 = vmatpush1.msra.mxu0 %v463
    %726 = vmatprep.subr.mxu0 0.0
    %727 = vmatpush1.msra.mxu0 %v464
    %728 = vmatprep.subr.mxu0 0.0
    %729 = vmatpush1.msra.mxu0 %v465
    %730 = vmatprep.subr.mxu0 0.0
    %731 = vmatpush1.msra.mxu0 %v466
    %732 = vmatprep.subr.mxu0 0.0
    %733 = vmatpush1.msra.mxu0 %v467
    %734 = vmatprep.subr.mxu0 0.0
    %735 = vmatpush1.msra.mxu0 %v468
    %736 = vmatprep.subr.mxu0 0.0
    %737 = vmatpush1.msra.mxu0 %v469
    %738 = vmatprep.subr.mxu0 0.0
    %739 = vmatpush1.msra.mxu0 %v470
    %740 = vmatprep.subr.mxu0 0.0
    %741 = vmatpush1.msra.mxu0 %v471
    %742 = vmatprep.subr.mxu0 0.0
    %743 = vmatpush1.msra.mxu0 %v472
    %744 = vmatprep.subr.mxu0 0.0
    %745 = vmatpush1.msra.mxu0 %v473
    %746 = vmatprep.subr.mxu0 0.0
    %747 = vmatpush1.msra.mxu0 %v474
    %748 = vmatprep.subr.mxu0 0.0
    %749 = vmatpush1.msra.mxu0 %v475
    %750 = vmatprep.subr.mxu0 0.0
    %751 = vmatpush1.msra.mxu0 %v476
    %752 = vmatprep.subr.mxu0 0.0
    %753 = vmatpush1.msra.mxu0 %v477
    %754 = vmatprep.subr.mxu0 0.0
    %755 = vmatpush1.msra.mxu0 %v478
    %756 = vmatprep.subr.mxu0 0.0
    %757 = vmatpush1.msra.mxu0 %v479
    %758 = vmatprep.subr.mxu0 0.0
    %759 = vmatpush1.msra.mxu0 %v480
    %760 = vmatprep.subr.mxu0 0.0
    %761 = vmatpush1.msra.mxu0 %v481
    %762 = vmatprep.subr.mxu0 0.0
    %763 = vmatpush1.msra.mxu0 %v482
    %764 = vmatprep.mubr.f32.mxu0 %v550
    %765 = vmatmul.mubr.f32.gmra.mrb[0].mxu0 %v542
    %v766 = vpop.f32.mrb[0].mxu0
    %v767 = vadd.f32 %v697, %v766
    %v768 = vpop.f32.mrb[0].mxu0
    %769 = vdwg.mxu0
    %770 = vmatprep.subr.mxu0 0.0
    %771 = vmatpush1.msra.mxu0 %v483
    %772 = vmatprep.subr.mxu0 0.0
    %773 = vmatpush1.msra.mxu0 %v484
    %774 = vmatprep.subr.mxu0 0.0
    %775 = vmatpush1.msra.mxu0 %v485
    %776 = vmatprep.subr.mxu0 0.0
    %777 = vmatpush1.msra.mxu0 %v486
    %778 = vmatprep.subr.mxu0 0.0
    %779 = vmatpush1.msra.mxu0 %v487
    %780 = vmatprep.subr.mxu0 0.0
    %781 = vmatpush1.msra.mxu0 %v488
    %782 = vmatprep.subr.mxu0 0.0
    %783 = vmatpush1.msra.mxu0 %v489
    %784 = vmatprep.subr.mxu0 0.0
    %785 = vmatpush1.msra.mxu0 %v490
    %786 = vmatprep.subr.mxu0 0.0
    %787 = vmatpush1.msra.mxu0 %v491
    %788 = vmatprep.subr.mxu0 0.0
    %789 = vmatpush1.msra.mxu0 %v492
    %790 = vmatprep.subr.mxu0 0.0
    %791 = vmatpush1.msra.mxu0 %v493
    %792 = vmatprep.subr.mxu0 0.0
    %793 = vmatpush1.msra.mxu0 %v494
    %794 = vmatprep.subr.mxu0 0.0
    %795 = vmatpush1.msra.mxu0 %v495
    %796 = vmatprep.subr.mxu0 0.0
    %797 = vmatpush1.msra.mxu0 %v496
    %798 = vmatprep.subr.mxu0 0.0
    %799 = vmatpush1.msra.mxu0 %v497
    %800 = vmatprep.subr.mxu0 0.0
    %801 = vmatpush1.msra.mxu0 %v498
    %802 = vmatprep.subr.mxu0 0.0
    %803 = vmatpush1.msra.mxu0 %v499
    %804 = vmatprep.subr.mxu0 0.0
    %805 = vmatpush1.msra.mxu0 %v500
    %806 = vmatprep.subr.mxu0 0.0
    %807 = vmatpush1.msra.mxu0 %v501
    %808 = vmatprep.subr.mxu0 0.0
    %809 = vmatpush1.msra.mxu0 %v502
    %810 = vmatprep.subr.mxu0 0.0
    %811 = vmatpush1.msra.mxu0 %v503
    %812 = vmatprep.subr.mxu0 0.0
    %813 = vmatpush1.msra.mxu0 %v504
    %814 = vmatprep.subr.mxu0 0.0
    %815 = vmatpush1.msra.mxu0 %v505
    %816 = vmatprep.subr.mxu0 0.0
    %817 = vmatpush1.msra.mxu0 %v506
    %818 = vmatprep.subr.mxu0 0.0
    %819 = vmatpush1.msra.mxu0 %v507
    %820 = vmatprep.subr.mxu0 0.0
    %821 = vmatpush1.msra.mxu0 %v508
    %822 = vmatprep.subr.mxu0 0.0
    %823 = vmatpush1.msra.mxu0 %v509
    %824 = vmatprep.subr.mxu0 0.0
    %825 = vmatpush1.msra.mxu0 %v510
    %826 = vmatprep.subr.mxu0 0.0
    %827 = vmatpush1.msra.mxu0 %v511
    %828 = vmatprep.subr.mxu0 0.0
    %829 = vmatpush1.msra.mxu0 %v512
    %830 = vmatprep.subr.mxu0 0.0
    %831 = vmatpush1.msra.mxu0 %v513
    %832 = vmatprep.subr.mxu0 0.0
    %833 = vmatpush1.msra.mxu0 %v514
    %834 = vmatprep.mubr.f32.mxu0 %v551
    %835 = vmatmul.mubr.f32.gmra.mrb[0].mxu0 %v549
    %v836 = vpop.f32.mrb[0].mxu0
    %v837 = vadd.f32 %v767, %v836
    %v838 = vpop.f32.mrb[0].mxu0
    %839 = vdwg.mxu0
    %840 = vmatprep.subr.mxu0 0.0
    %841 = vmatpush1.msra.mxu0 %v387
    %842 = vmatprep.subr.mxu0 0.0
    %843 = vmatpush1.msra.mxu0 %v388
    %844 = vmatprep.subr.mxu0 0.0
    %845 = vmatpush1.msra.mxu0 %v389
    %846 = vmatprep.subr.mxu0 0.0
    %847 = vmatpush1.msra.mxu0 %v390
    %848 = vmatprep.subr.mxu0 0.0
    %849 = vmatpush1.msra.mxu0 %v391
    %850 = vmatprep.subr.mxu0 0.0
    %851 = vmatpush1.msra.mxu0 %v392
    %852 = vmatprep.subr.mxu0 0.0
    %853 = vmatpush1.msra.mxu0 %v393
    %854 = vmatprep.subr.mxu0 0.0
    %855 = vmatpush1.msra.mxu0 %v394
    %856 = vmatprep.subr.mxu0 0.0
    %857 = vmatpush1.msra.mxu0 %v395
    %858 = vmatprep.subr.mxu0 0.0
    %859 = vmatpush1.msra.mxu0 %v396
    %860 = vmatprep.subr.mxu0 0.0
    %861 = vmatpush1.msra.mxu0 %v397
    %862 = vmatprep.subr.mxu0 0.0
    %863 = vmatpush1.msra.mxu0 %v398
    %864 = vmatprep.subr.mxu0 0.0
    %865 = vmatpush1.msra.mxu0 %v399
    %866 = vmatprep.subr.mxu0 0.0
    %867 = vmatpush1.msra.mxu0 %v400
    %868 = vmatprep.subr.mxu0 0.0
    %869 = vmatpush1.msra.mxu0 %v401
    %870 = vmatprep.subr.mxu0 0.0
    %871 = vmatpush1.msra.mxu0 %v402
    %872 = vmatprep.subr.mxu0 0.0
    %873 = vmatpush1.msra.mxu0 %v403
    %874 = vmatprep.subr.mxu0 0.0
    %875 = vmatpush1.msra.mxu0 %v404
    %876 = vmatprep.subr.mxu0 0.0
    %877 = vmatpush1.msra.mxu0 %v405
    %878 = vmatprep.subr.mxu0 0.0
    %879 = vmatpush1.msra.mxu0 %v406
    %880 = vmatprep.subr.mxu0 0.0
    %881 = vmatpush1.msra.mxu0 %v407
    %882 = vmatprep.subr.mxu0 0.0
    %883 = vmatpush1.msra.mxu0 %v408
    %884 = vmatprep.subr.mxu0 0.0
    %885 = vmatpush1.msra.mxu0 %v409
    %886 = vmatprep.subr.mxu0 0.0
    %887 = vmatpush1.msra.mxu0 %v410
    %888 = vmatprep.subr.mxu0 0.0
    %889 = vmatpush1.msra.mxu0 %v411
    %890 = vmatprep.subr.mxu0 0.0
    %891 = vmatpush1.msra.mxu0 %v412
    %892 = vmatprep.subr.mxu0 0.0
    %893 = vmatpush1.msra.mxu0 %v413
    %894 = vmatprep.subr.mxu0 0.0
    %895 = vmatpush1.msra.mxu0 %v414
    %896 = vmatprep.subr.mxu0 0.0
    %897 = vmatpush1.msra.mxu0 %v415
    %898 = vmatprep.subr.mxu0 0.0
    %899 = vmatpush1.msra.mxu0 %v416
    %900 = vmatprep.subr.mxu0 0.0
    %901 = vmatpush1.msra.mxu0 %v417
    %902 = vmatprep.subr.mxu0 0.0
    %903 = vmatpush1.msra.mxu0 %v418
    %904 = vmatprep.mubr.f32.mxu0 %v380
    %905 = vmatmul.mubr.f32.gmra.mrb[0].mxu0 %v379
    %v906 = vpop.f32.mrb[0].mxu0
    %v907 = vadd.f32 0.0, %v906
    %v908 = vpop.f32.mrb[0].mxu0
    %909 = vdwg.mxu0
    %910 = vmatprep.subr.mxu0 0.0
    %911 = vmatpush1.msra.mxu0 %v419
    %912 = vmatprep.subr.mxu0 0.0
    %913 = vmatpush1.msra.mxu0 %v420
    %914 = vmatprep.subr.mxu0 0.0
    %915 = vmatpush1.msra.mxu0 %v421
    %916 = vmatprep.subr.mxu0 0.0
    %917 = vmatpush1.msra.mxu0 %v422
    %918 = vmatprep.subr.mxu0 0.0
    %919 = vmatpush1.msra.mxu0 %v423
    %920 = vmatprep.subr.mxu0 0.0
    %921 = vmatpush1.msra.mxu0 %v424
    %922 = vmatprep.subr.mxu0 0.0
    %923 = vmatpush1.msra.mxu0 %v425
    %924 = vmatprep.subr.mxu0 0.0
    %925 = vmatpush1.msra.mxu0 %v426
    %926 = vmatprep.subr.mxu0 0.0
    %927 = vmatpush1.msra.mxu0 %v427
    %928 = vmatprep.subr.mxu0 0.0
    %929 = vmatpush1.msra.mxu0 %v428
    %930 = vmatprep.subr.mxu0 0.0
    %931 = vmatpush1.msra.mxu0 %v429
    %932 = vmatprep.subr.mxu0 0.0
    %933 = vmatpush1.msra.mxu0 %v430
    %934 = vmatprep.subr.mxu0 0.0
    %935 = vmatpush1.msra.mxu0 %v431
    %936 = vmatprep.subr.mxu0 0.0
    %937 = vmatpush1.msra.mxu0 %v432
    %938 = vmatprep.subr.mxu0 0.0
    %939 = vmatpush1.msra.mxu0 %v433
    %940 = vmatprep.subr.mxu0 0.0
    %941 = vmatpush1.msra.mxu0 %v434
    %942 = vmatprep.subr.mxu0 0.0
    %943 = vmatpush1.msra.mxu0 %v435
    %944 = vmatprep.subr.mxu0 0.0
    %945 = vmatpush1.msra.mxu0 %v436
    %946 = vmatprep.subr.mxu0 0.0
    %947 = vmatpush1.msra.mxu0 %v437
    %948 = vmatprep.subr.mxu0 0.0
    %949 = vmatpush1.msra.mxu0 %v438
    %950 = vmatprep.subr.mxu0 0.0
    %951 = vmatpush1.msra.mxu0 %v439
    %952 = vmatprep.subr.mxu0 0.0
    %953 = vmatpush1.msra.mxu0 %v440
    %954 = vmatprep.subr.mxu0 0.0
    %955 = vmatpush1.msra.mxu0 %v441
    %956 = vmatprep.subr.mxu0 0.0
    %957 = vmatpush1.msra.mxu0 %v442
    %958 = vmatprep.subr.mxu0 0.0
    %959 = vmatpush1.msra.mxu0 %v443
    %960 = vmatprep.subr.mxu0 0.0
    %961 = vmatpush1.msra.mxu0 %v444
    %962 = vmatprep.subr.mxu0 0.0
    %963 = vmatpush1.msra.mxu0 %v445
    %964 = vmatprep.subr.mxu0 0.0
    %965 = vmatpush1.msra.mxu0 %v446
    %966 = vmatprep.subr.mxu0 0.0
    %967 = vmatpush1.msra.mxu0 %v447
    %968 = vmatprep.subr.mxu0 0.0
    %969 = vmatpush1.msra.mxu0 %v448
    %970 = vmatprep.subr.mxu0 0.0
    %971 = vmatpush1.msra.mxu0 %v449
    %972 = vmatprep.subr.mxu0 0.0
    %973 = vmatpush1.msra.mxu0 %v450
    %974 = vmatprep.mubr.f32.mxu0 %v382
    %975 = vmatmul.mubr.f32.gmra.mrb[0].mxu0 %v381
    %v976 = vpop.f32.mrb[0].mxu0
    %v977 = vadd.f32 %v907, %v976
    %v978 = vpop.f32.mrb[0].mxu0
    %979 = vdwg.mxu0
    %980 = vmatprep.subr.mxu0 0.0
    %981 = vmatpush1.msra.mxu0 %v451
    %982 = vmatprep.subr.mxu0 0.0
    %983 = vmatpush1.msra.mxu0 %v452
    %984 = vmatprep.subr.mxu0 0.0
    %985 = vmatpush1.msra.mxu0 %v453
    %986 = vmatprep.subr.mxu0 0.0
    %987 = vmatpush1.msra.mxu0 %v454
    %988 = vmatprep.subr.mxu0 0.0
    %989 = vmatpush1.msra.mxu0 %v455
    %990 = vmatprep.subr.mxu0 0.0
    %991 = vmatpush1.msra.mxu0 %v456
    %992 = vmatprep.subr.mxu0 0.0
    %993 = vmatpush1.msra.mxu0 %v457
    %994 = vmatprep.subr.mxu0 0.0
    %995 = vmatpush1.msra.mxu0 %v458
    %996 = vmatprep.subr.mxu0 0.0
    %997 = vmatpush1.msra.mxu0 %v459
    %998 = vmatprep.subr.mxu0 0.0
    %999 = vmatpush1.msra.mxu0 %v460
    %1000 = vmatprep.subr.mxu0 0.0
    %1001 = vmatpush1.msra.mxu0 %v461
    %1002 = vmatprep.subr.mxu0 0.0
    %1003 = vmatpush1.msra.mxu0 %v462
    %1004 = vmatprep.subr.mxu0 0.0
    %1005 = vmatpush1.msra.mxu0 %v463
    %1006 = vmatprep.subr.mxu0 0.0
    %1007 = vmatpush1.msra.mxu0 %v464
    %1008 = vmatprep.subr.mxu0 0.0
    %1009 = vmatpush1.msra.mxu0 %v465
    %1010 = vmatprep.subr.mxu0 0.0
    %1011 = vmatpush1.msra.mxu0 %v466
    %1012 = vmatprep.subr.mxu0 0.0
    %1013 = vmatpush1.msra.mxu0 %v467
    %1014 = vmatprep.subr.mxu0 0.0
    %1015 = vmatpush1.msra.mxu0 %v468
    %1016 = vmatprep.subr.mxu0 0.0
    %1017 = vmatpush1.msra.mxu0 %v469
    %1018 = vmatprep.subr.mxu0 0.0
    %1019 = vmatpush1.msra.mxu0 %v470
    %1020 = vmatprep.subr.mxu0 0.0
    %1021 = vmatpush1.msra.mxu0 %v471
    %1022 = vmatprep.subr.mxu0 0.0
    %1023 = vmatpush1.msra.mxu0 %v472
    %1024 = vmatprep.subr.mxu0 0.0
    %1025 = vmatpush1.msra.mxu0 %v473
    %1026 = vmatprep.subr.mxu0 0.0
    %1027 = vmatpush1.msra.mxu0 %v474
    %1028 = vmatprep.subr.mxu0 0.0
    %1029 = vmatpush1.msra.mxu0 %v475
    %1030 = vmatprep.subr.mxu0 0.0
    %1031 = vmatpush1.msra.mxu0 %v476
    %1032 = vmatprep.subr.mxu0 0.0
    %1033 = vmatpush1.msra.mxu0 %v477
    %1034 = vmatprep.subr.mxu0 0.0
    %1035 = vmatpush1.msra.mxu0 %v478
    %1036 = vmatprep.subr.mxu0 0.0
    %1037 = vmatpush1.msra.mxu0 %v479
    %1038 = vmatprep.subr.mxu0 0.0
    %1039 = vmatpush1.msra.mxu0 %v480
    %1040 = vmatprep.subr.mxu0 0.0
    %1041 = vmatpush1.msra.mxu0 %v481
    %1042 = vmatprep.subr.mxu0 0.0
    %1043 = vmatpush1.msra.mxu0 %v482
    %1044 = vmatprep.mubr.f32.mxu0 %v384
    %1045 = vmatmul.mubr.f32.gmra.mrb[0].mxu0 %v383
    %v1046 = vpop.f32.mrb[0].mxu0
    %v1047 = vadd.f32 %v977, %v1046
    %v1048 = vpop.f32.mrb[0].mxu0
    %1049 = vdwg.mxu0
    %1050 = vmatprep.subr.mxu0 0.0
    %1051 = vmatpush1.msra.mxu0 %v483
    %1052 = vmatprep.subr.mxu0 0.0
    %1053 = vmatpush1.msra.mxu0 %v484
    %1054 = vmatprep.subr.mxu0 0.0
    %1055 = vmatpush1.msra.mxu0 %v485
    %1056 = vmatprep.subr.mxu0 0.0
    %1057 = vmatpush1.msra.mxu0 %v486
    %1058 = vmatprep.subr.mxu0 0.0
    %1059 = vmatpush1.msra.mxu0 %v487
    %1060 = vmatprep.subr.mxu0 0.0
    %1061 = vmatpush1.msra.mxu0 %v488
    %1062 = vmatprep.subr.mxu0 0.0
    %1063 = vmatpush1.msra.mxu0 %v489
    %1064 = vmatprep.subr.mxu0 0.0
    %1065 = vmatpush1.msra.mxu0 %v490
    %1066 = vmatprep.subr.mxu0 0.0
    %1067 = vmatpush1.msra.mxu0 %v491
    %1068 = vmatprep.subr.mxu0 0.0
    %1069 = vmatpush1.msra.mxu0 %v492
    %1070 = vmatprep.subr.mxu0 0.0
    %1071 = vmatpush1.msra.mxu0 %v493
    %1072 = vmatprep.subr.mxu0 0.0
    %1073 = vmatpush1.msra.mxu0 %v494
    %1074 = vmatprep.subr.mxu0 0.0
    %1075 = vmatpush1.msra.mxu0 %v495
    %1076 = vmatprep.subr.mxu0 0.0
    %1077 = vmatpush1.msra.mxu0 %v496
    %1078 = vmatprep.subr.mxu0 0.0
    %1079 = vmatpush1.msra.mxu0 %v497
    %1080 = vmatprep.subr.mxu0 0.0
    %1081 = vmatpush1.msra.mxu0 %v498
    %1082 = vmatprep.subr.mxu0 0.0
    %1083 = vmatpush1.msra.mxu0 %v499
    %1084 = vmatprep.subr.mxu0 0.0
    %1085 = vmatpush1.msra.mxu0 %v500
    %1086 = vmatprep.subr.mxu0 0.0
    %1087 = vmatpush1.msra.mxu0 %v501
    %1088 = vmatprep.subr.mxu0 0.0
    %1089 = vmatpush1.msra.mxu0 %v502
    %1090 = vmatprep.subr.mxu0 0.0
    %1091 = vmatpush1.msra.mxu0 %v503
    %1092 = vmatprep.subr.mxu0 0.0
    %1093 = vmatpush1.msra.mxu0 %v504
    %1094 = vmatprep.subr.mxu0 0.0
    %1095 = vmatpush1.msra.mxu0 %v505
    %1096 = vmatprep.subr.mxu0 0.0
    %1097 = vmatpush1.msra.mxu0 %v506
    %1098 = vmatprep.subr.mxu0 0.0
    %1099 = vmatpush1.msra.mxu0 %v507
    %1100 = vmatprep.subr.mxu0 0.0
    %1101 = vmatpush1.msra.mxu0 %v508
    %1102 = vmatprep.subr.mxu0 0.0
    %1103 = vmatpush1.msra.mxu0 %v509
    %1104 = vmatprep.subr.mxu0 0.0
    %1105 = vmatpush1.msra.mxu0 %v510
    %1106 = vmatprep.subr.mxu0 0.0
    %1107 = vmatpush1.msra.mxu0 %v511
    %1108 = vmatprep.subr.mxu0 0.0
    %1109 = vmatpush1.msra.mxu0 %v512
    %1110 = vmatprep.subr.mxu0 0.0
    %1111 = vmatpush1.msra.mxu0 %v513
    %1112 = vmatprep.subr.mxu0 0.0
    %1113 = vmatpush1.msra.mxu0 %v514
    %1114 = vmatprep.mubr.f32.mxu0 %v386
    %1115 = vmatmul.mubr.f32.gmra.mrb[0].mxu0 %v385
    %v1116 = vpop.f32.mrb[0].mxu0
    %v1117 = vadd.f32 %v1047, %v1116
    %v1118 = vpop.f32.mrb[0].mxu0
    %1119 = vdwg.mxu0
    %v1120 = vld [vmem:[%s7] sm:$0x1]
    %v1122 = vlaneseq
    %v1123 = vshrl.u32 %v1122, 7
    %v1124 = vsub.s32 0, %v1123
    %v1125 = vrot.slane %v515, %v1124
    %v1127 = vadd.f32 %v837, %v1125
    %vm1128 = vcmp.gt.f32.partialorder %v1127, 0.0
    %v1129 = vmul.f32 %v1127, 0.2
    %v1130 = vsel %vm1128, %v1127, %v1129
    %v1132 = vlaneseq
    %v1133 = vshrl.u32 %v1132, 7
    %v1134 = vsub.s32 0, %v1133
    %v1135 = vrot.slane %v1120, %v1134
    %v1137 = vmul.f32 %v1130, %v1135
    %vm1138 = vcmask 254976
    %v1139 = vsel %vm1138, %v1137, 0.0
    %1140 = vadd.xlane.f32.xlu0 %v1139
    %v1141 = vpop.xlane.xlu0 %1140
    %v1142 = vstv %s37
    %v1143 = vadd.f32 %v1141, %v1142
    %v1144 = vadd.f32 %v1117, %v1125
    %vm1145 = vcmp.gt.f32.partialorder %v1144, 0.0
    %v1146 = vmul.f32 %v1144, 0.2
    %v1147 = vsel %vm1145, %v1144, %v1146
    %v1148 = vmul.f32 %v1147, %v1135
    %v1149 = vsel %vm1138, %v1148, 0.0
    %1150 = vadd.xlane.f32.xlu0 %v1149
    %v1151 = vpop.xlane.xlu0 %1150
    %v1152 = vadd.f32 %v1151, %v1142
    %v1153 = vld [vmem:[%s4] sm:$0x3]
    %1155 = vset.pattern.permute.xlu0 0
    %1156 = vperm.xlu0 %1155, %v1153
    %v1157 = vpop.permute.xlu0 %1156
    %v1159 = vmul.f32 %v1157, %v837
    %v1160 = vsub.f32 1.0, %v1153
    %1162 = vset.pattern.permute.xlu0 0
    %1163 = vperm.xlu0 %1162, %v1160
    %v1164 = vpop.permute.xlu0 %1163
    %v1166 = vmul.f32 %v1164, %v1117
    %v1167 = vadd.f32 %v1159, %v1166
    %v1168 = vadd.f32 %v1167, %v1125
    %vm1169 = vcmp.gt.f32.partialorder %v1168, 0.0
    %v1170 = vsel %vm1169, 1.0, 0.2
    %v1171 = vmul.f32 %v1170, %v1135
    %v1172 = vld [vmem:[%s8] sm:$0xff]
    %v1173 = vld [vmem:[%s8 + $0x8] sm:$0xff]
    %v1174 = vld [vmem:[%s8 + $0x10] sm:$0xff]
    %v1175 = vld [vmem:[%s8 + $0x18] sm:$0xff]
    %vm1176 = vcmask 261120
    %v1178 = vsel %vm1176, %v1171, 0
    %1180 = vmatprep.subr.mxu0 0.0
    %1181 = vmatpush1.msra.mxu0 %v1172
    %1182 = vmatprep.subr.mxu0 0.0
    %1183 = vmatpush1.msra.mxu0 %v1173
    %1184 = vmatprep.subr.mxu0 0.0
    %1185 = vmatpush1.msra.mxu0 %v1174
    %1186 = vmatprep.subr.mxu0 0.0
    %1187 = vmatpush1.msra.mxu0 %v1175
    %1188 = vmatprep.subr.mxu0 0.0
    %1189 = vmatpush1.msra.mxu0 0.0
    %1190 = vmatprep.subr.mxu0 0.0
    %1191 = vmatpush1.msra.mxu0 0.0
    %1192 = vmatprep.subr.mxu0 0.0
    %1193 = vmatpush1.msra.mxu0 0.0
    %1194 = vmatprep.subr.mxu0 0.0
    %1195 = vmatpush1.msra.mxu0 0.0
    %1196 = vmatprep.subr.mxu0 0.0
    %1197 = vmatpush1.msra.mxu0 0.0
    %1198 = vmatprep.subr.mxu0 0.0
    %1199 = vmatpush1.msra.mxu0 0.0
    %1200 = vmatprep.subr.mxu0 0.0
    %1201 = vmatpush1.msra.mxu0 0.0
    %1202 = vmatprep.subr.mxu0 0.0
    %1203 = vmatpush1.msra.mxu0 0.0
    %1204 = vmatprep.subr.mxu0 0.0
    %1205 = vmatpush1.msra.mxu0 0.0
    %1206 = vmatprep.subr.mxu0 0.0
    %1207 = vmatpush1.msra.mxu0 0.0
    %1208 = vmatprep.subr.mxu0 0.0
    %1209 = vmatpush1.msra.mxu0 0.0
    %1210 = vmatprep.subr.mxu0 0.0
    %1211 = vmatpush1.msra.mxu0 0.0
    %1212 = vmatprep.subr.mxu0 0.0
    %1213 = vmatpush1.msra.mxu0 0.0
    %1214 = vmatprep.subr.mxu0 0.0
    %1215 = vmatpush1.msra.mxu0 0.0
    %1216 = vmatprep.subr.mxu0 0.0
    %1217 = vmatpush1.msra.mxu0 0.0
    %1218 = vmatprep.subr.mxu0 0.0
    %1219 = vmatpush1.msra.mxu0 0.0
    %1220 = vmatprep.subr.mxu0 0.0
    %1221 = vmatpush1.msra.mxu0 0.0
    %1222 = vmatprep.subr.mxu0 0.0
    %1223 = vmatpush1.msra.mxu0 0.0
    %1224 = vmatprep.subr.mxu0 0.0
    %1225 = vmatpush1.msra.mxu0 0.0
    %1226 = vmatprep.subr.mxu0 0.0
    %1227 = vmatpush1.msra.mxu0 0.0
    %1228 = vmatprep.subr.mxu0 0.0
    %1229 = vmatpush1.msra.mxu0 0.0
    %1230 = vmatprep.subr.mxu0 0.0
    %1231 = vmatpush1.msra.mxu0 0.0
    %1232 = vmatprep.subr.mxu0 0.0
    %1233 = vmatpush1.msra.mxu0 0.0
    %1234 = vmatprep.subr.mxu0 0.0
    %1235 = vmatpush1.msra.mxu0 0.0
    %1236 = vmatprep.subr.mxu0 0.0
    %1237 = vmatpush1.msra.mxu0 0.0
    %1238 = vmatprep.subr.mxu0 0.0
    %1239 = vmatpush1.msra.mxu0 0.0
    %1240 = vmatprep.subr.mxu0 0.0
    %1241 = vmatpush1.msra.mxu0 0.0
    %1242 = vmatprep.subr.mxu0 0.0
    %1243 = vmatpush1.msra.mxu0 0.0
    %1244 = vmatprep.mubr.f32.mxu0 0.0
    %1245 = vmatmul.mubr.f32.gmra.mrb[0].mxu0 %v1178
    %v1246 = vpop.f32.mrb[0].mxu0
    %v1247 = vadd.f32 0.0, %v1246
    %v1248 = vpop.f32.mrb[0].mxu0
    %1249 = vdwg.mxu0
    %v1250 = vmul.f32 %v1247, %v1171
    %v1251 = vsel %vm1138, %v1250, 0.0
    %1252 = vadd.xlane.f32.xlu0 %v1251
    %v1253 = vpop.xlane.xlu0 %1252
    %v1254 = vadd.f32 %v1253, 1e-12
    %v1255 = vrsqrt.pop %v1254
    %v1256 = vmul.f32 %v1254, %v1255
    %vm1257 = vcmp.eq.f32.partialorder %v1254, inf
    %v1258 = vsel %vm1257, %v1254, %v1256
    %vm1259 = vcmp.eq.f32.partialorder %v1254, 0.0
    %v1260 = vand.u32 %v1254, 2147483648
    %v1261 = vsel %vm1259, %v1260, %v1258
    %v1262 = vsub.f32 %v1261, 1.0
    %v1263 = vmul.f32 %v1262, %v1262
    %v1264 = vsub.f32 %v1152, %v1143
    %vm1265 = vcmask 1041408
    %v1266 = vsel %vm1265, %v1264, 0.0
    %v1267 = vrot.slane %v1266, 4
    %v1268 = vadd.f32 %v1266, %v1267
    %v1269 = vrot.slane %v1268, 2
    %v1270 = vadd.f32 %v1268, %v1269
    %v1271 = vrot.slane %v1270, 1
    %v1272 = vadd.f32 %v1270, %v1271
    %v1273 = vsel %vm1265, %v1263, 0.0
    %v1274 = vrot.slane %v1273, 4
    %v1275 = vadd.f32 %v1273, %v1274
    %v1276 = vrot.slane %v1275, 2
    %v1277 = vadd.f32 %v1275, %v1276
    %v1278 = vrot.slane %v1277, 1
    %v1279 = vadd.f32 %v1277, %v1278
    %v1280 = vmul.f32 %v1279, 10.0
    %v1281 = vadd.f32 %v1272, %v1280
    %v1282 = vmul.f32 %v1281, 0.5
    %vm1283 = vcmask 0
    %1284 = vst.msk [vmem:[#allocation3] sm:$0x1] %vm1283, %v1282
    // Predicated region
    $region42: #{tpu_custom_call.1} parent=1 // pred_check
      _
    $region43: #{tpu_custom_call.1} parent=1 // pred_check_branch
      %1286 = sbr.rel (0) target = $region45
    $region44: #{tpu_custom_call.1} parent=1 // pred_region
      %s1288 = ssub.s32 16, 16
      %1289 = vsyncadd [#allocation4], %s1288
      %s1291 = sshll.u32 [#allocation3], 4
      %s1292 = int_to_ptr.vmem [resolvable:$true] %s1291
      %1294 = dma.vmem_to_hbm [thread:$0]  %s1292, 16, %s10, [#allocation4]
    $region45: #{tpu_custom_call.1} parent=1 // pred_fallthru
      _
    // Predicated region
    $region46: #{tpu_custom_call.1} parent=1 // pred_check
      _
    $region47: #{tpu_custom_call.1} parent=1 // pred_check_branch
      %1296 = sbr.rel (0) target = $region49
    $region48: #{tpu_custom_call.1} parent=1 // pred_region
      %1297 = dma.done [#allocation4], 16
    $region49: #{tpu_custom_call.1} parent=1 // pred_fallthru
      _
    %1298 = vsyncpa [#allocation4], 1

</llo_original>
